<compile_context>
chip_gen: v5e
topology: v5e:2x2
jax: 0.10.0
libtpu: 0.0.40
codegen_flags: <defaults>
</compile_context>

<pallas_src>
import functools
import math

import jax
import jax.numpy as jnp
from jax import lax
from jax.experimental import pallas as pl
from jax.experimental.pallas import tpu as pltpu


# ----------------------------------------------------------------------------
# Pallas kernel: one block of `batch_block` batch elements per grid step
# ----------------------------------------------------------------------------
def _transformer_block_kernel(
    x_ref,                      # (bb, 1, T*D)  packed, lane-dense activations
    ln1_s_ref, ln1_b_ref,       # (1, D), (1, D)  f32
    w_qkv_ref, b_qkv_ref,       # (D, 3D) bf16 (Q pre-scaled), (1, 3D) f32
    wo_ref, bo_ref,             # (D, D)  bf16, (1, D) f32
    ln2_s_ref, ln2_b_ref,       # (1, D), (1, D)  f32
    w1_ref, b1_ref,             # (D, 4D) bf16, (1, 4D) f32
    w2_ref, b2_ref,             # (4D, D) bf16, (1, D) f32
    out_ref,                    # (bb, 1, T*D)  packed
    xs_ref,                     # VMEM scratch (bb*T, D) f32 : unpacked rows
    ctx_ref,                    # VMEM scratch (bb*T, D) f32 : attention context
    *, num_heads, head_dim, seq_len,
):
    eps = jnp.float32(1e-5)
    bb = x_ref.shape[0]
    TD = x_ref.shape[2]
    T = seq_len
    D = TD // T
    H, hd = num_heads, head_dim
    R = bb * T
    inv_D = jnp.float32(1.0 / D)

    # ---- Unpack lane-dense (bb, 1, T*D) block into (R, D) token rows ----------
    # Static slices + VMEM scratch stores (all shape casts are leading-dim only).
    for b in range(bb):
        for t in range(T):
            xs_ref[b * T + t:b * T + t + 1, :] = (
                x_ref[b:b + 1, 0:1, t * D:(t + 1) * D]
                .astype(jnp.float32).reshape(1, D))
    x = xs_ref[...]                                            # (R, D) f32

    # ---------------- LayerNorm (one-pass, f32) ----------------
    def layer_norm(y, s_ref, b_ref):
        m1 = jnp.sum(y, axis=-1, keepdims=True) * inv_D
        m2 = jnp.sum(y * y, axis=-1, keepdims=True) * inv_D
        var = m2 - m1 * m1          # one-pass form; fine for O(1) activations
        return (y - m1) * lax.rsqrt(var + eps) * s_ref[...] + b_ref[...]

    xn1 = layer_norm(x, ln1_s_ref, ln1_b_ref)

    # ---------------- Fused QKV projection (bf16 in / f32 acc) ----------------
    qkv = jnp.dot(xn1.astype(jnp.bfloat16), w_qkv_ref[...],
                  preferred_element_type=jnp.float32) + b_qkv_ref[...]

    # Head layout: column h*hd + e.  1/sqrt(hd) already folded into Q weights.
    q3 = qkv[:, 0 * D:1 * D].reshape(bb, T, D).astype(jnp.bfloat16)   # (bb, T, D)
    # K transposed ONCE per block -> contraction dim leads on the matmul RHS.
    kT3 = jnp.swapaxes(qkv[:, 1 * D:2 * D].reshape(bb, T, D), 1, 2
                       ).astype(jnp.bfloat16)                          # (bb, D, T)
    v3 = qkv[:, 2 * D:3 * D].reshape(bb, T, D).astype(jnp.bfloat16)   # (bb, T, D)

    # Hoisted additive causal mask (finite negative: no inf-inf NaN risk).
    row = lax.broadcasted_iota(jnp.int32, (T, T), 0)
    col = lax.broadcasted_iota(jnp.int32, (T, T), 1)
    mask_add = jnp.where(col <= row, jnp.float32(0.0), jnp.float32(-1e30))
    mask_add = jnp.broadcast_to(mask_add[None], (bb, T, T))

    # ---------------- Causal multi-head self-attention ----------------
    for h in range(H):             # static loop over heads (batched over bb)
        c0 = h * hd
        qh = q3[:, :, c0:c0 + hd]          # (bb, T, hd)
        kTh = kT3[:, c0:c0 + hd, :]        # (bb, hd, T)
        vh = v3[:, :, c0:c0 + hd]          # (bb, T, hd)

        s = jnp.einsum('btd,bds->bts', qh, kTh,
                       preferred_element_type=jnp.float32) + mask_add
        m = jnp.max(s, axis=-1, keepdims=True)
        p = jnp.exp(s - m)
        denom = jnp.sum(p, axis=-1, keepdims=True)
        attn = p * pl.reciprocal(denom, approx=True)          # EUP, not VPU div
        ctxh = jnp.einsum('bts,bsd->btd', attn.astype(jnp.bfloat16), vh,
                          preferred_element_type=jnp.float32)  # (bb, T, hd) f32
        ctx_ref[:, c0:c0 + hd] = ctxh.reshape(R, hd)           # scratch, no concat

    ctx = ctx_ref[...]                                          # (R, D) f32

    # ---------------- Output projection (single (R,D)@(D,D) matmul) ----------
    attn_out = jnp.dot(ctx.astype(jnp.bfloat16), wo_ref[...],
                       preferred_element_type=jnp.float32) + bo_ref[...]

    # dropout (identity) + residual 1 (f32)
    x1 = x + attn_out

    # ---------------- LayerNorm 2 ----------------
    xn2 = layer_norm(x1, ln2_s_ref, ln2_b_ref)

    # ---------------- FeedForward: Linear -> GELU(tanh) -> Linear -------------
    h1 = jnp.dot(xn2.astype(jnp.bfloat16), w1_ref[...],
                 preferred_element_type=jnp.float32) + b1_ref[...]
    c = jnp.float32(math.sqrt(2.0 / math.pi))
    h1 = 0.5 * h1 * (1.0 + jnp.tanh(c * (h1 + 0.044715 * h1 * h1 * h1)))
    ffn_out = jnp.dot(h1.astype(jnp.bfloat16), w2_ref[...],
                      preferred_element_type=jnp.float32) + b2_ref[...]

    # dropout (identity) + residual 2
    y = (x1 + ffn_out).astype(out_ref.dtype)                    # (R, D)

    # ---- Repack (R, D) rows into the lane-dense (bb, 1, T*D) output block ----
    for b in range(bb):
        for t in range(T):
            out_ref[b:b + 1, 0:1, t * D:(t + 1) * D] = (
                y[b * T + t:b * T + t + 1, :].reshape(1, 1, D))


# ----------------------------------------------------------------------------
# Wrapper: packs activations, fuses / bf16-casts weights, builds the pallas_call
# ----------------------------------------------------------------------------
def transformer_block(x, params, *, num_heads, batch_block=None):
    B, T, D = x.shape
    head_dim = D // num_heads
    if batch_block is None:
        # >=2 grid steps: software pipelining engages and v7x's 2 TensorCores
        # both get work (dimension_semantics=("parallel",)).
        batch_block = 1 if B > 1 else B
    assert B % batch_block == 0, "batch must divide evenly into batch blocks"
    grid = (B // batch_block,)

    wdt = jnp.bfloat16  # MXU-native weight dtype
    inv_sqrt_hd = 1.0 / math.sqrt(head_dim)

    # Fused QKV weight (D, 3D) and bias (1, 3D); 1/sqrt(hd) folded into Q.
    w_qkv = jnp.concatenate(
        [(params['wq'] * inv_sqrt_hd).reshape(D, D),
         params['wk'].reshape(D, D),
         params['wv'].reshape(D, D)], axis=1).astype(wdt)
    b_qkv = jnp.concatenate(
        [(params['bq'] * inv_sqrt_hd).reshape(1, D),
         params['bk'].reshape(1, D),
         params['bv'].reshape(1, D)], axis=1).astype(jnp.float32)
    wo = params['wo'].reshape(D, D).astype(wdt)
    w1 = params['w1'].astype(wdt)
    w2 = params['w2'].astype(wdt)

    param_list = [
        params['ln1_scale'].astype(jnp.float32),
        params['ln1_shift'].astype(jnp.float32),
        w_qkv, b_qkv,
        wo, params['bo'].astype(jnp.float32),
        params['ln2_scale'].astype(jnp.float32),
        params['ln2_shift'].astype(jnp.float32),
        w1, params['b1'].astype(jnp.float32),
        w2, params['b2'].astype(jnp.float32),
    ]

    # Grid-invariant weights: whole-array VMEM residents (single copy, not
    # double-buffered per grid step).
    weight_spec = pl.BlockSpec(memory_space=pltpu.MemorySpace.VMEM)

    # Lane-dense activation I/O: tokens packed along lanes -> (B, 1, T*D).
    TD = T * D
    x_packed = x.reshape(B, 1, TD)

    in_specs = [pl.BlockSpec((batch_block, 1, TD), lambda g: (g, 0, 0))]
    in_specs += [weight_spec] * len(param_list)
    out_specs = pl.BlockSpec((batch_block, 1, TD), lambda g: (g, 0, 0))

    kernel = functools.partial(
        _transformer_block_kernel,
        num_heads=num_heads, head_dim=head_dim, seq_len=T)

    rows = batch_block * T
    out_packed = pl.pallas_call(
        kernel,
        out_shape=jax.ShapeDtypeStruct((B, 1, TD), x.dtype),
        grid_spec=pltpu.PrefetchScalarGridSpec(
            num_scalar_prefetch=0,
            grid=grid,
            in_specs=in_specs,
            out_specs=out_specs,
            scratch_shapes=[
                pltpu.VMEM((rows, D), jnp.float32),   # unpacked activation rows
                pltpu.VMEM((rows, D), jnp.float32),   # attention context accum
            ],
        ),
        compiler_params=pltpu.CompilerParams(
            dimension_semantics=("parallel",),
            vmem_limit_bytes=40 * 1024 * 1024,        # v7x-safe (64 MiB VMEM)
        ),
    )(x_packed, *param_list)
    return out_packed.reshape(B, T, D)


# ----------------------------------------------------------------------------
# Pure-JAX f32 reference (mirrors the PyTorch module semantics)
# ----------------------------------------------------------------------------
def transformer_block_ref(x, params, *, num_heads):
    B, T, D = x.shape
    hd = D // num_heads
    eps = 1e-5

    def ln(y, s, b):
        mu = jnp.mean(y, axis=-1, keepdims=True)
        var = jnp.mean((y - mu) ** 2, axis=-1, keepdims=True)
        return (y - mu) / jnp.sqrt(var + eps) * s[0] + b[0]

    xn1 = ln(x, params['ln1_scale'], params['ln1_shift'])
    q = jnp.einsum('btd,dhe->bhte', xn1, params['wq']) + params['bq'][None, :, None, :]
    k = jnp.einsum('btd,dhe->bhte', xn1, params['wk']) + params['bk'][None, :, None, :]
    v = jnp.einsum('btd,dhe->bhte', xn1, params['wv']) + params['bv'][None, :, None, :]
    scores = jnp.einsum('bhte,bhse->bhts', q, k) / math.sqrt(hd)
    mask = jnp.tril(jnp.ones((T, T), dtype=bool))
    scores = jnp.where(mask[None, None], scores, -jnp.inf)
    attn = jax.nn.softmax(scores, axis=-1)
    ctx = jnp.einsum('bhts,bhse->bhte', attn, v)
    attn_out = jnp.einsum('bhte,heo->bto', ctx, params['wo']) + params['bo'][0]
    x1 = x + attn_out

    xn2 = ln(x1, params['ln2_scale'], params['ln2_shift'])
    h = xn2 @ params['w1'] + params['b1'][0]
    c = math.sqrt(2.0 / math.pi)
    h = 0.5 * h * (1.0 + jnp.tanh(c * (h + 0.044715 * h ** 3)))
    ffn_out = h @ params['w2'] + params['b2'][0]
    return x1 + ffn_out


# ----------------------------------------------------------------------------
# Main
# ----------------------------------------------------------------------------
if __name__ == "__main__":
    gpt_config = {
        'embed_dim': 32,
        'num_heads': 4,
        'context_length': 8,
        'dropout_rate': 0.0,   # dropout is identity (inference semantics)
        'qkv_bias': True,
    }
    B, T, D = 2, gpt_config['context_length'], gpt_config['embed_dim']
    H = gpt_config['num_heads']
    hd = D // H
    Dff = 4 * D

    key = jax.random.PRNGKey(0)
    keys = jax.random.split(key, 12)
    s = 0.02  # init scale

    params = {
        'ln1_scale': jnp.ones((1, D), jnp.float32),
        'ln1_shift': jnp.zeros((1, D), jnp.float32),
        'wq': s * jax.random.normal(keys[0], (D, H, hd), jnp.float32),
        'bq': s * jax.random.normal(keys[1], (H, hd), jnp.float32),
        'wk': s * jax.random.normal(keys[2], (D, H, hd), jnp.float32),
        'bk': s * jax.random.normal(keys[3], (H, hd), jnp.float32),
        'wv': s * jax.random.normal(keys[4], (D, H, hd), jnp.float32),
        'bv': s * jax.random.normal(keys[5], (H, hd), jnp.float32),
        'wo': s * jax.random.normal(keys[6], (H, hd, D), jnp.float32),
        'bo': s * jax.random.normal(keys[7], (1, D), jnp.float32),
        'ln2_scale': jnp.ones((1, D), jnp.float32),
        'ln2_shift': jnp.zeros((1, D), jnp.float32),
        'w1': s * jax.random.normal(keys[8], (D, Dff), jnp.float32),
        'b1': s * jax.random.normal(keys[9], (1, Dff), jnp.float32),
        'w2': s * jax.random.normal(keys[10], (Dff, D), jnp.float32),
        'b2': s * jax.random.normal(keys[11], (1, D), jnp.float32),
    }

    x = jax.random.normal(jax.random.PRNGKey(42), (B, T, D), jnp.float32)

    out = transformer_block(x, params, num_heads=H)
    out = jax.block_until_ready(out)

    ref = transformer_block_ref(x, params, num_heads=H)
    assert out.shape == (B, T, D)
    # bf16 matmul operands (f32 accumulate) + approx-reciprocal softmax vs. the
    # pure-f32 reference: residual structure + 0.02-scale weights keep the
    # absolute error << 1e-2.
    max_err = jnp.max(jnp.abs(out - ref))
    assert jnp.allclose(out, ref, atol=1e-2, rtol=1e-2), f"max abs err {max_err}"

    print("KERNEL_OK")
</pallas_src>

<mosaic_0001>
module attributes {stable_mosaic.version = 11 : i64} {
  func.func @_transformer_block_kernel(%arg0: i32, %arg1: memref<1x1x256xf32, #tpu.memory_space<vmem>>, %arg2: memref<1x32xf32, #tpu.memory_space<vmem>>, %arg3: memref<1x32xf32, #tpu.memory_space<vmem>>, %arg4: memref<32x96xbf16, #tpu.memory_space<vmem>>, %arg5: memref<1x96xf32, #tpu.memory_space<vmem>>, %arg6: memref<32x32xbf16, #tpu.memory_space<vmem>>, %arg7: memref<1x32xf32, #tpu.memory_space<vmem>>, %arg8: memref<1x32xf32, #tpu.memory_space<vmem>>, %arg9: memref<1x32xf32, #tpu.memory_space<vmem>>, %arg10: memref<32x128xbf16, #tpu.memory_space<vmem>>, %arg11: memref<1x128xf32, #tpu.memory_space<vmem>>, %arg12: memref<128x32xbf16, #tpu.memory_space<vmem>>, %arg13: memref<1x32xf32, #tpu.memory_space<vmem>>, %arg14: memref<1x1x256xf32, #tpu.memory_space<vmem>>, %arg15: memref<8x32xf32, #tpu.memory_space<vmem>>, %arg16: memref<8x32xf32, #tpu.memory_space<vmem>>) attributes {dimension_semantics = [#tpu.dimension_semantics<parallel>], iteration_bounds = array<i64: 2>, scalar_prefetch = 0 : i64, scratch_operands = 2 : i64, tpu.core_type = #tpu.core_type<tc>, window_params = [{transform_indices = @transform_0, window_bounds = array<i64: 1, 1, 256>}, {pipeline_mode = #tpu.pipeline_mode<synchronous>, transform_indices = @transform_1, window_bounds = array<i64: 1, 32>}, {pipeline_mode = #tpu.pipeline_mode<synchronous>, transform_indices = @transform_2, window_bounds = array<i64: 1, 32>}, {pipeline_mode = #tpu.pipeline_mode<synchronous>, transform_indices = @transform_3, window_bounds = array<i64: 32, 96>}, {pipeline_mode = #tpu.pipeline_mode<synchronous>, transform_indices = @transform_4, window_bounds = array<i64: 1, 96>}, {pipeline_mode = #tpu.pipeline_mode<synchronous>, transform_indices = @transform_5, window_bounds = array<i64: 32, 32>}, {pipeline_mode = #tpu.pipeline_mode<synchronous>, transform_indices = @transform_6, window_bounds = array<i64: 1, 32>}, {pipeline_mode = #tpu.pipeline_mode<synchronous>, transform_indices = @transform_7, window_bounds = array<i64: 1, 32>}, {pipeline_mode = #tpu.pipeline_mode<synchronous>, transform_indices = @transform_8, window_bounds = array<i64: 1, 32>}, {pipeline_mode = #tpu.pipeline_mode<synchronous>, transform_indices = @transform_9, window_bounds = array<i64: 32, 128>}, {pipeline_mode = #tpu.pipeline_mode<synchronous>, transform_indices = @transform_10, window_bounds = array<i64: 1, 128>}, {pipeline_mode = #tpu.pipeline_mode<synchronous>, transform_indices = @transform_11, window_bounds = array<i64: 128, 32>}, {pipeline_mode = #tpu.pipeline_mode<synchronous>, transform_indices = @transform_12, window_bounds = array<i64: 1, 32>}, {transform_indices = @transform_13, window_bounds = array<i64: 1, 1, 256>}]} {
    %c0 = arith.constant 0 : index
    %c0_0 = arith.constant 0 : index
    %c0_1 = arith.constant 0 : index
    %0 = vector.load %arg1[%c0, %c0_0, %c0_1] : memref<1x1x256xf32, #tpu.memory_space<vmem>>, vector<1x1x32xf32>
    %1 = vector.shape_cast %0 : vector<1x1x32xf32> to vector<1x32xf32>
    %c0_2 = arith.constant 0 : index
    %c0_3 = arith.constant 0 : index
    %2 = vector.load %arg15[%c0_2, %c0_3] : memref<8x32xf32, #tpu.memory_space<vmem>>, vector<1x32xf32>
    tpu.vector_store %arg15[%c0_2, %c0_3], %1 {strides = array<i32>} : memref<8x32xf32, #tpu.memory_space<vmem>>, vector<1x32xf32>,
    %c0_4 = arith.constant 0 : index
    %c0_5 = arith.constant 0 : index
    %c32 = arith.constant 32 : index
    %3 = vector.load %arg1[%c0_4, %c0_5, %c32] : memref<1x1x256xf32, #tpu.memory_space<vmem>>, vector<1x1x32xf32>
    %4 = vector.shape_cast %3 : vector<1x1x32xf32> to vector<1x32xf32>
    %c1 = arith.constant 1 : index
    %c0_6 = arith.constant 0 : index
    %5 = vector.load %arg15[%c1, %c0_6] : memref<8x32xf32, #tpu.memory_space<vmem>>, vector<1x32xf32>
    tpu.vector_store %arg15[%c1, %c0_6], %4 {strides = array<i32>} : memref<8x32xf32, #tpu.memory_space<vmem>>, vector<1x32xf32>,
    %c0_7 = arith.constant 0 : index
    %c0_8 = arith.constant 0 : index
    %c64 = arith.constant 64 : index
    %6 = vector.load %arg1[%c0_7, %c0_8, %c64] : memref<1x1x256xf32, #tpu.memory_space<vmem>>, vector<1x1x32xf32>
    %7 = vector.shape_cast %6 : vector<1x1x32xf32> to vector<1x32xf32>
    %c2 = arith.constant 2 : index
    %c0_9 = arith.constant 0 : index
    %8 = vector.load %arg15[%c2, %c0_9] : memref<8x32xf32, #tpu.memory_space<vmem>>, vector<1x32xf32>
    tpu.vector_store %arg15[%c2, %c0_9], %7 {strides = array<i32>} : memref<8x32xf32, #tpu.memory_space<vmem>>, vector<1x32xf32>,
    %c0_10 = arith.constant 0 : index
    %c0_11 = arith.constant 0 : index
    %c96 = arith.constant 96 : index
    %9 = vector.load %arg1[%c0_10, %c0_11, %c96] : memref<1x1x256xf32, #tpu.memory_space<vmem>>, vector<1x1x32xf32>
    %10 = vector.shape_cast %9 : vector<1x1x32xf32> to vector<1x32xf32>
    %c3 = arith.constant 3 : index
    %c0_12 = arith.constant 0 : index
    %11 = vector.load %arg15[%c3, %c0_12] : memref<8x32xf32, #tpu.memory_space<vmem>>, vector<1x32xf32>
    tpu.vector_store %arg15[%c3, %c0_12], %10 {strides = array<i32>} : memref<8x32xf32, #tpu.memory_space<vmem>>, vector<1x32xf32>,
    %c0_13 = arith.constant 0 : index
    %c0_14 = arith.constant 0 : index
    %c128 = arith.constant 128 : index
    %12 = vector.load %arg1[%c0_13, %c0_14, %c128] : memref<1x1x256xf32, #tpu.memory_space<vmem>>, vector<1x1x32xf32>
    %13 = vector.shape_cast %12 : vector<1x1x32xf32> to vector<1x32xf32>
    %c4 = arith.constant 4 : index
    %c0_15 = arith.constant 0 : index
    %14 = vector.load %arg15[%c4, %c0_15] : memref<8x32xf32, #tpu.memory_space<vmem>>, vector<1x32xf32>
    tpu.vector_store %arg15[%c4, %c0_15], %13 {strides = array<i32>} : memref<8x32xf32, #tpu.memory_space<vmem>>, vector<1x32xf32>,
    %c0_16 = arith.constant 0 : index
    %c0_17 = arith.constant 0 : index
    %c160 = arith.constant 160 : index
    %15 = vector.load %arg1[%c0_16, %c0_17, %c160] : memref<1x1x256xf32, #tpu.memory_space<vmem>>, vector<1x1x32xf32>
    %16 = vector.shape_cast %15 : vector<1x1x32xf32> to vector<1x32xf32>
    %c5 = arith.constant 5 : index
    %c0_18 = arith.constant 0 : index
    %17 = vector.load %arg15[%c5, %c0_18] : memref<8x32xf32, #tpu.memory_space<vmem>>, vector<1x32xf32>
    tpu.vector_store %arg15[%c5, %c0_18], %16 {strides = array<i32>} : memref<8x32xf32, #tpu.memory_space<vmem>>, vector<1x32xf32>,
    %c0_19 = arith.constant 0 : index
    %c0_20 = arith.constant 0 : index
    %c192 = arith.constant 192 : index
    %18 = vector.load %arg1[%c0_19, %c0_20, %c192] : memref<1x1x256xf32, #tpu.memory_space<vmem>>, vector<1x1x32xf32>
    %19 = vector.shape_cast %18 : vector<1x1x32xf32> to vector<1x32xf32>
    %c6 = arith.constant 6 : index
    %c0_21 = arith.constant 0 : index
    %20 = vector.load %arg15[%c6, %c0_21] : memref<8x32xf32, #tpu.memory_space<vmem>>, vector<1x32xf32>
    tpu.vector_store %arg15[%c6, %c0_21], %19 {strides = array<i32>} : memref<8x32xf32, #tpu.memory_space<vmem>>, vector<1x32xf32>,
    %c0_22 = arith.constant 0 : index
    %c0_23 = arith.constant 0 : index
    %c224 = arith.constant 224 : index
    %21 = vector.load %arg1[%c0_22, %c0_23, %c224] : memref<1x1x256xf32, #tpu.memory_space<vmem>>, vector<1x1x32xf32>
    %22 = vector.shape_cast %21 : vector<1x1x32xf32> to vector<1x32xf32>
    %c7 = arith.constant 7 : index
    %c0_24 = arith.constant 0 : index
    %23 = vector.load %arg15[%c7, %c0_24] : memref<8x32xf32, #tpu.memory_space<vmem>>, vector<1x32xf32>
    tpu.vector_store %arg15[%c7, %c0_24], %22 {strides = array<i32>} : memref<8x32xf32, #tpu.memory_space<vmem>>, vector<1x32xf32>,
    %c0_25 = arith.constant 0 : index
    %c0_26 = arith.constant 0 : index
    %24 = vector.load %arg15[%c0_25, %c0_26] : memref<8x32xf32, #tpu.memory_space<vmem>>, vector<8x32xf32>
    %cst = arith.constant dense<0.000000e+00> : vector<8xf32>
    %25 = vector.multi_reduction <add>, %24, %cst [1] : vector<8x32xf32> to vector<8xf32>
    %26 = vector.shape_cast %25 : vector<8xf32> to vector<8x1xf32>
    %cst_27 = arith.constant 3.125000e-02 : f32
    %27 = vector.broadcast %cst_27 : f32 to vector<8x1xf32>
    %28 = arith.mulf %26, %27 : vector<8x1xf32>
    %29 = arith.mulf %24, %24 : vector<8x32xf32>
    %cst_28 = arith.constant dense<0.000000e+00> : vector<8xf32>
    %30 = vector.multi_reduction <add>, %29, %cst_28 [1] : vector<8x32xf32> to vector<8xf32>
    %31 = vector.shape_cast %30 : vector<8xf32> to vector<8x1xf32>
    %cst_29 = arith.constant 3.125000e-02 : f32
    %32 = vector.broadcast %cst_29 : f32 to vector<8x1xf32>
    %33 = arith.mulf %31, %32 : vector<8x1xf32>
    %34 = arith.mulf %28, %28 : vector<8x1xf32>
    %35 = arith.subf %33, %34 : vector<8x1xf32>
    %36 = vector.broadcast %28 : vector<8x1xf32> to vector<8x32xf32>
    %37 = arith.subf %24, %36 : vector<8x32xf32>
    %cst_30 = arith.constant 9.99999974E-6 : f32
    %38 = vector.broadcast %cst_30 : f32 to vector<8x1xf32>
    %39 = arith.addf %35, %38 : vector<8x1xf32>
    %40 = math.rsqrt %39 : vector<8x1xf32>
    %41 = vector.broadcast %40 : vector<8x1xf32> to vector<8x32xf32>
    %42 = arith.mulf %37, %41 : vector<8x32xf32>
    %c0_31 = arith.constant 0 : index
    %c0_32 = arith.constant 0 : index
    %43 = vector.load %arg2[%c0_31, %c0_32] : memref<1x32xf32, #tpu.memory_space<vmem>>, vector<1x32xf32>
    %44 = vector.broadcast %43 : vector<1x32xf32> to vector<8x32xf32>
    %45 = arith.mulf %42, %44 : vector<8x32xf32>
    %c0_33 = arith.constant 0 : index
    %c0_34 = arith.constant 0 : index
    %46 = vector.load %arg3[%c0_33, %c0_34] : memref<1x32xf32, #tpu.memory_space<vmem>>, vector<1x32xf32>
    %47 = vector.broadcast %46 : vector<1x32xf32> to vector<8x32xf32>
    %48 = arith.addf %45, %47 : vector<8x32xf32>
    %49 = arith.truncf %48 : vector<8x32xf32> to vector<8x32xbf16>
    %c0_35 = arith.constant 0 : index
    %c0_36 = arith.constant 0 : index
    %50 = vector.load %arg4[%c0_35, %c0_36] : memref<32x96xbf16, #tpu.memory_space<vmem>>, vector<32x96xbf16>
    %cst_37 = arith.constant dense<0.000000e+00> : vector<8x96xf32>
    %51 = tpu.matmul %49, %50, %cst_37 {dimension_numbers = #tpu.dot_dimension_numbers<[1], [0], [0], [1], [0, 0, 1, 1], [], []>} : vector<8x32xbf16>, vector<32x96xbf16>, vector<8x96xf32> -> vector<8x96xf32>
    %c0_38 = arith.constant 0 : index
    %c0_39 = arith.constant 0 : index
    %52 = vector.load %arg5[%c0_38, %c0_39] : memref<1x96xf32, #tpu.memory_space<vmem>>, vector<1x96xf32>
    %53 = vector.broadcast %52 : vector<1x96xf32> to vector<8x96xf32>
    %54 = arith.addf %51, %53 : vector<8x96xf32>
    %55 = vector.extract_strided_slice %54 {offsets = [0, 0], sizes = [8, 32], strides = [1, 1]} : vector<8x96xf32> to vector<8x32xf32>
    %56 = vector.shape_cast %55 : vector<8x32xf32> to vector<1x8x32xf32>
    %57 = arith.truncf %56 : vector<1x8x32xf32> to vector<1x8x32xbf16>
    %58 = vector.extract_strided_slice %54 {offsets = [0, 32], sizes = [8, 32], strides = [1, 1]} : vector<8x96xf32> to vector<8x32xf32>
    %59 = vector.shape_cast %58 : vector<8x32xf32> to vector<1x8x32xf32>
    %60 = tpu.transpose %59, [0, 2, 1] : vector<1x8x32xf32> -> vector<1x32x8xf32>
    %61 = arith.truncf %60 : vector<1x32x8xf32> to vector<1x32x8xbf16>
    %62 = vector.extract_strided_slice %54 {offsets = [0, 64], sizes = [8, 32], strides = [1, 1]} : vector<8x96xf32> to vector<8x32xf32>
    %63 = vector.shape_cast %62 : vector<8x32xf32> to vector<1x8x32xf32>
    %64 = arith.truncf %63 : vector<1x8x32xf32> to vector<1x8x32xbf16>
    %65 = tpu.iota {dimensions = array<i32: 0>} : vector<8x8xi32>
    %66 = tpu.iota {dimensions = array<i32: 1>} : vector<8x8xi32>
    %67 = arith.cmpi sle, %66, %65 : vector<8x8xi32>
    %cst_40 = arith.constant 0.000000e+00 : f32
    %cst_41 = arith.constant -1.000000e+30 : f32
    %68 = vector.broadcast %cst_40 : f32 to vector<8x8xf32>
    %69 = vector.broadcast %cst_41 : f32 to vector<8x8xf32>
    %70 = arith.select %67, %68, %69 : vector<8x8xi1>, vector<8x8xf32>
    %71 = vector.shape_cast %70 : vector<8x8xf32> to vector<1x8x8xf32>
    %72 = vector.extract_strided_slice %57 {offsets = [0, 0, 0], sizes = [1, 8, 8], strides = [1, 1, 1]} : vector<1x8x32xbf16> to vector<1x8x8xbf16>
    %73 = vector.extract_strided_slice %61 {offsets = [0, 0, 0], sizes = [1, 8, 8], strides = [1, 1, 1]} : vector<1x32x8xbf16> to vector<1x8x8xbf16>
    %74 = vector.extract_strided_slice %64 {offsets = [0, 0, 0], sizes = [1, 8, 8], strides = [1, 1, 1]} : vector<1x8x32xbf16> to vector<1x8x8xbf16>
    "tpu.trace_start"() <{level = 10 : i32, message = "btd,bds->bts"}> : () -> ()
    %cst_42 = arith.constant dense<0.000000e+00> : vector<1x8x8xf32>
    %75 = tpu.matmul %72, %73, %cst_42 {dimension_numbers = #tpu.dot_dimension_numbers<[2], [1], [1], [2], [0, 0, 0, 1, 1, 2], [0], [0]>} : vector<1x8x8xbf16>, vector<1x8x8xbf16>, vector<1x8x8xf32> -> vector<1x8x8xf32>
    "tpu.trace_stop"() : () -> ()
    %76 = arith.addf %75, %71 : vector<1x8x8xf32>
    %cst_43 = arith.constant dense<0xFF800000> : vector<1x8xf32>
    %77 = vector.multi_reduction <maximumf>, %76, %cst_43 [2] : vector<1x8x8xf32> to vector<1x8xf32>
    %78 = vector.shape_cast %77 : vector<1x8xf32> to vector<1x8x1xf32>
    %79 = vector.broadcast %78 : vector<1x8x1xf32> to vector<1x8x8xf32>
    %80 = arith.subf %76, %79 : vector<1x8x8xf32>
    %81 = math.exp %80 : vector<1x8x8xf32>
    %cst_44 = arith.constant dense<0.000000e+00> : vector<1x8xf32>
    %82 = vector.multi_reduction <add>, %81, %cst_44 [2] : vector<1x8x8xf32> to vector<1x8xf32>
    %83 = vector.shape_cast %82 : vector<1x8xf32> to vector<1x8x1xf32>
    %84 = tpu.reciprocal %83 {approx = true} : vector<1x8x1xf32> -> vector<1x8x1xf32>
    %85 = vector.broadcast %84 : vector<1x8x1xf32> to vector<1x8x8xf32>
    %86 = arith.mulf %81, %85 : vector<1x8x8xf32>
    %87 = arith.truncf %86 : vector<1x8x8xf32> to vector<1x8x8xbf16>
    "tpu.trace_start"() <{level = 10 : i32, message = "bts,bsd->btd"}> : () -> ()
    %cst_45 = arith.constant dense<0.000000e+00> : vector<1x8x8xf32>
    %88 = tpu.matmul %87, %74, %cst_45 {dimension_numbers = #tpu.dot_dimension_numbers<[2], [1], [1], [2], [0, 0, 0, 1, 1, 2], [0], [0]>} : vector<1x8x8xbf16>, vector<1x8x8xbf16>, vector<1x8x8xf32> -> vector<1x8x8xf32>
    "tpu.trace_stop"() : () -> ()
    %89 = vector.shape_cast %88 : vector<1x8x8xf32> to vector<8x8xf32>
    %c0_46 = arith.constant 0 : index
    %c0_47 = arith.constant 0 : index
    %90 = vector.load %arg16[%c0_46, %c0_47] : memref<8x32xf32, #tpu.memory_space<vmem>>, vector<8x8xf32>
    tpu.vector_store %arg16[%c0_46, %c0_47], %89 {strides = array<i32>} : memref<8x32xf32, #tpu.memory_space<vmem>>, vector<8x8xf32>,
    %91 = vector.extract_strided_slice %57 {offsets = [0, 0, 8], sizes = [1, 8, 8], strides = [1, 1, 1]} : vector<1x8x32xbf16> to vector<1x8x8xbf16>
    %92 = vector.extract_strided_slice %61 {offsets = [0, 8, 0], sizes = [1, 8, 8], strides = [1, 1, 1]} : vector<1x32x8xbf16> to vector<1x8x8xbf16>
    %93 = vector.extract_strided_slice %64 {offsets = [0, 0, 8], sizes = [1, 8, 8], strides = [1, 1, 1]} : vector<1x8x32xbf16> to vector<1x8x8xbf16>
    "tpu.trace_start"() <{level = 10 : i32, message = "btd,bds->bts"}> : () -> ()
    %cst_48 = arith.constant dense<0.000000e+00> : vector<1x8x8xf32>
    %94 = tpu.matmul %91, %92, %cst_48 {dimension_numbers = #tpu.dot_dimension_numbers<[2], [1], [1], [2], [0, 0, 0, 1, 1, 2], [0], [0]>} : vector<1x8x8xbf16>, vector<1x8x8xbf16>, vector<1x8x8xf32> -> vector<1x8x8xf32>
    "tpu.trace_stop"() : () -> ()
    %95 = arith.addf %94, %71 : vector<1x8x8xf32>
    %cst_49 = arith.constant dense<0xFF800000> : vector<1x8xf32>
    %96 = vector.multi_reduction <maximumf>, %95, %cst_49 [2] : vector<1x8x8xf32> to vector<1x8xf32>
    %97 = vector.shape_cast %96 : vector<1x8xf32> to vector<1x8x1xf32>
    %98 = vector.broadcast %97 : vector<1x8x1xf32> to vector<1x8x8xf32>
    %99 = arith.subf %95, %98 : vector<1x8x8xf32>
    %100 = math.exp %99 : vector<1x8x8xf32>
    %cst_50 = arith.constant dense<0.000000e+00> : vector<1x8xf32>
    %101 = vector.multi_reduction <add>, %100, %cst_50 [2] : vector<1x8x8xf32> to vector<1x8xf32>
    %102 = vector.shape_cast %101 : vector<1x8xf32> to vector<1x8x1xf32>
    %103 = tpu.reciprocal %102 {approx = true} : vector<1x8x1xf32> -> vector<1x8x1xf32>
    %104 = vector.broadcast %103 : vector<1x8x1xf32> to vector<1x8x8xf32>
    %105 = arith.mulf %100, %104 : vector<1x8x8xf32>
    %106 = arith.truncf %105 : vector<1x8x8xf32> to vector<1x8x8xbf16>
    "tpu.trace_start"() <{level = 10 : i32, message = "bts,bsd->btd"}> : () -> ()
    %cst_51 = arith.constant dense<0.000000e+00> : vector<1x8x8xf32>
    %107 = tpu.matmul %106, %93, %cst_51 {dimension_numbers = #tpu.dot_dimension_numbers<[2], [1], [1], [2], [0, 0, 0, 1, 1, 2], [0], [0]>} : vector<1x8x8xbf16>, vector<1x8x8xbf16>, vector<1x8x8xf32> -> vector<1x8x8xf32>
    "tpu.trace_stop"() : () -> ()
    %108 = vector.shape_cast %107 : vector<1x8x8xf32> to vector<8x8xf32>
    %c0_52 = arith.constant 0 : index
    %c8 = arith.constant 8 : index
    %109 = vector.load %arg16[%c0_52, %c8] : memref<8x32xf32, #tpu.memory_space<vmem>>, vector<8x8xf32>
    tpu.vector_store %arg16[%c0_52, %c8], %108 {strides = array<i32>} : memref<8x32xf32, #tpu.memory_space<vmem>>, vector<8x8xf32>,
    %110 = vector.extract_strided_slice %57 {offsets = [0, 0, 16], sizes = [1, 8, 8], strides = [1, 1, 1]} : vector<1x8x32xbf16> to vector<1x8x8xbf16>
    %111 = vector.extract_strided_slice %61 {offsets = [0, 16, 0], sizes = [1, 8, 8], strides = [1, 1, 1]} : vector<1x32x8xbf16> to vector<1x8x8xbf16>
    %112 = vector.extract_strided_slice %64 {offsets = [0, 0, 16], sizes = [1, 8, 8], strides = [1, 1, 1]} : vector<1x8x32xbf16> to vector<1x8x8xbf16>
    "tpu.trace_start"() <{level = 10 : i32, message = "btd,bds->bts"}> : () -> ()
    %cst_53 = arith.constant dense<0.000000e+00> : vector<1x8x8xf32>
    %113 = tpu.matmul %110, %111, %cst_53 {dimension_numbers = #tpu.dot_dimension_numbers<[2], [1], [1], [2], [0, 0, 0, 1, 1, 2], [0], [0]>} : vector<1x8x8xbf16>, vector<1x8x8xbf16>, vector<1x8x8xf32> -> vector<1x8x8xf32>
    "tpu.trace_stop"() : () -> ()
    %114 = arith.addf %113, %71 : vector<1x8x8xf32>
    %cst_54 = arith.constant dense<0xFF800000> : vector<1x8xf32>
    %115 = vector.multi_reduction <maximumf>, %114, %cst_54 [2] : vector<1x8x8xf32> to vector<1x8xf32>
    %116 = vector.shape_cast %115 : vector<1x8xf32> to vector<1x8x1xf32>
    %117 = vector.broadcast %116 : vector<1x8x1xf32> to vector<1x8x8xf32>
    %118 = arith.subf %114, %117 : vector<1x8x8xf32>
    %119 = math.exp %118 : vector<1x8x8xf32>
    %cst_55 = arith.constant dense<0.000000e+00> : vector<1x8xf32>
    %120 = vector.multi_reduction <add>, %119, %cst_55 [2] : vector<1x8x8xf32> to vector<1x8xf32>
    %121 = vector.shape_cast %120 : vector<1x8xf32> to vector<1x8x1xf32>
    %122 = tpu.reciprocal %121 {approx = true} : vector<1x8x1xf32> -> vector<1x8x1xf32>
    %123 = vector.broadcast %122 : vector<1x8x1xf32> to vector<1x8x8xf32>
    %124 = arith.mulf %119, %123 : vector<1x8x8xf32>
    %125 = arith.truncf %124 : vector<1x8x8xf32> to vector<1x8x8xbf16>
    "tpu.trace_start"() <{level = 10 : i32, message = "bts,bsd->btd"}> : () -> ()
    %cst_56 = arith.constant dense<0.000000e+00> : vector<1x8x8xf32>
    %126 = tpu.matmul %125, %112, %cst_56 {dimension_numbers = #tpu.dot_dimension_numbers<[2], [1], [1], [2], [0, 0, 0, 1, 1, 2], [0], [0]>} : vector<1x8x8xbf16>, vector<1x8x8xbf16>, vector<1x8x8xf32> -> vector<1x8x8xf32>
    "tpu.trace_stop"() : () -> ()
    %127 = vector.shape_cast %126 : vector<1x8x8xf32> to vector<8x8xf32>
    %c0_57 = arith.constant 0 : index
    %c16 = arith.constant 16 : index
    %128 = vector.load %arg16[%c0_57, %c16] : memref<8x32xf32, #tpu.memory_space<vmem>>, vector<8x8xf32>
    tpu.vector_store %arg16[%c0_57, %c16], %127 {strides = array<i32>} : memref<8x32xf32, #tpu.memory_space<vmem>>, vector<8x8xf32>,
    %129 = vector.extract_strided_slice %57 {offsets = [0, 0, 24], sizes = [1, 8, 8], strides = [1, 1, 1]} : vector<1x8x32xbf16> to vector<1x8x8xbf16>
    %130 = vector.extract_strided_slice %61 {offsets = [0, 24, 0], sizes = [1, 8, 8], strides = [1, 1, 1]} : vector<1x32x8xbf16> to vector<1x8x8xbf16>
    %131 = vector.extract_strided_slice %64 {offsets = [0, 0, 24], sizes = [1, 8, 8], strides = [1, 1, 1]} : vector<1x8x32xbf16> to vector<1x8x8xbf16>
    "tpu.trace_start"() <{level = 10 : i32, message = "btd,bds->bts"}> : () -> ()
    %cst_58 = arith.constant dense<0.000000e+00> : vector<1x8x8xf32>
    %132 = tpu.matmul %129, %130, %cst_58 {dimension_numbers = #tpu.dot_dimension_numbers<[2], [1], [1], [2], [0, 0, 0, 1, 1, 2], [0], [0]>} : vector<1x8x8xbf16>, vector<1x8x8xbf16>, vector<1x8x8xf32> -> vector<1x8x8xf32>
    "tpu.trace_stop"() : () -> ()
    %133 = arith.addf %132, %71 : vector<1x8x8xf32>
    %cst_59 = arith.constant dense<0xFF800000> : vector<1x8xf32>
    %134 = vector.multi_reduction <maximumf>, %133, %cst_59 [2] : vector<1x8x8xf32> to vector<1x8xf32>
    %135 = vector.shape_cast %134 : vector<1x8xf32> to vector<1x8x1xf32>
    %136 = vector.broadcast %135 : vector<1x8x1xf32> to vector<1x8x8xf32>
    %137 = arith.subf %133, %136 : vector<1x8x8xf32>
    %138 = math.exp %137 : vector<1x8x8xf32>
    %cst_60 = arith.constant dense<0.000000e+00> : vector<1x8xf32>
    %139 = vector.multi_reduction <add>, %138, %cst_60 [2] : vector<1x8x8xf32> to vector<1x8xf32>
    %140 = vector.shape_cast %139 : vector<1x8xf32> to vector<1x8x1xf32>
    %141 = tpu.reciprocal %140 {approx = true} : vector<1x8x1xf32> -> vector<1x8x1xf32>
    %142 = vector.broadcast %141 : vector<1x8x1xf32> to vector<1x8x8xf32>
    %143 = arith.mulf %138, %142 : vector<1x8x8xf32>
    %144 = arith.truncf %143 : vector<1x8x8xf32> to vector<1x8x8xbf16>
    "tpu.trace_start"() <{level = 10 : i32, message = "bts,bsd->btd"}> : () -> ()
    %cst_61 = arith.constant dense<0.000000e+00> : vector<1x8x8xf32>
    %145 = tpu.matmul %144, %131, %cst_61 {dimension_numbers = #tpu.dot_dimension_numbers<[2], [1], [1], [2], [0, 0, 0, 1, 1, 2], [0], [0]>} : vector<1x8x8xbf16>, vector<1x8x8xbf16>, vector<1x8x8xf32> -> vector<1x8x8xf32>
    "tpu.trace_stop"() : () -> ()
    %146 = vector.shape_cast %145 : vector<1x8x8xf32> to vector<8x8xf32>
    %c0_62 = arith.constant 0 : index
    %c24 = arith.constant 24 : index
    %147 = vector.load %arg16[%c0_62, %c24] : memref<8x32xf32, #tpu.memory_space<vmem>>, vector<8x8xf32>
    tpu.vector_store %arg16[%c0_62, %c24], %146 {strides = array<i32>} : memref<8x32xf32, #tpu.memory_space<vmem>>, vector<8x8xf32>,
    %c0_63 = arith.constant 0 : index
    %c0_64 = arith.constant 0 : index
    %148 = vector.load %arg16[%c0_63, %c0_64] : memref<8x32xf32, #tpu.memory_space<vmem>>, vector<8x32xf32>
    %149 = arith.truncf %148 : vector<8x32xf32> to vector<8x32xbf16>
    %c0_65 = arith.constant 0 : index
    %c0_66 = arith.constant 0 : index
    %150 = vector.load %arg6[%c0_65, %c0_66] : memref<32x32xbf16, #tpu.memory_space<vmem>>, vector<32x32xbf16>
    %cst_67 = arith.constant dense<0.000000e+00> : vector<8x32xf32>
    %151 = tpu.matmul %149, %150, %cst_67 {dimension_numbers = #tpu.dot_dimension_numbers<[1], [0], [0], [1], [0, 0, 1, 1], [], []>} : vector<8x32xbf16>, vector<32x32xbf16>, vector<8x32xf32> -> vector<8x32xf32>
    %c0_68 = arith.constant 0 : index
    %c0_69 = arith.constant 0 : index
    %152 = vector.load %arg7[%c0_68, %c0_69] : memref<1x32xf32, #tpu.memory_space<vmem>>, vector<1x32xf32>
    %153 = vector.broadcast %152 : vector<1x32xf32> to vector<8x32xf32>
    %154 = arith.addf %151, %153 : vector<8x32xf32>
    %155 = arith.addf %24, %154 : vector<8x32xf32>
    %cst_70 = arith.constant dense<0.000000e+00> : vector<8xf32>
    %156 = vector.multi_reduction <add>, %155, %cst_70 [1] : vector<8x32xf32> to vector<8xf32>
    %157 = vector.shape_cast %156 : vector<8xf32> to vector<8x1xf32>
    %cst_71 = arith.constant 3.125000e-02 : f32
    %158 = vector.broadcast %cst_71 : f32 to vector<8x1xf32>
    %159 = arith.mulf %157, %158 : vector<8x1xf32>
    %160 = arith.mulf %155, %155 : vector<8x32xf32>
    %cst_72 = arith.constant dense<0.000000e+00> : vector<8xf32>
    %161 = vector.multi_reduction <add>, %160, %cst_72 [1] : vector<8x32xf32> to vector<8xf32>
    %162 = vector.shape_cast %161 : vector<8xf32> to vector<8x1xf32>
    %cst_73 = arith.constant 3.125000e-02 : f32
    %163 = vector.broadcast %cst_73 : f32 to vector<8x1xf32>
    %164 = arith.mulf %162, %163 : vector<8x1xf32>
    %165 = arith.mulf %159, %159 : vector<8x1xf32>
    %166 = arith.subf %164, %165 : vector<8x1xf32>
    %167 = vector.broadcast %159 : vector<8x1xf32> to vector<8x32xf32>
    %168 = arith.subf %155, %167 : vector<8x32xf32>
    %cst_74 = arith.constant 9.99999974E-6 : f32
    %169 = vector.broadcast %cst_74 : f32 to vector<8x1xf32>
    %170 = arith.addf %166, %169 : vector<8x1xf32>
    %171 = math.rsqrt %170 : vector<8x1xf32>
    %172 = vector.broadcast %171 : vector<8x1xf32> to vector<8x32xf32>
    %173 = arith.mulf %168, %172 : vector<8x32xf32>
    %c0_75 = arith.constant 0 : index
    %c0_76 = arith.constant 0 : index
    %174 = vector.load %arg8[%c0_75, %c0_76] : memref<1x32xf32, #tpu.memory_space<vmem>>, vector<1x32xf32>
    %175 = vector.broadcast %174 : vector<1x32xf32> to vector<8x32xf32>
    %176 = arith.mulf %173, %175 : vector<8x32xf32>
    %c0_77 = arith.constant 0 : index
    %c0_78 = arith.constant 0 : index
    %177 = vector.load %arg9[%c0_77, %c0_78] : memref<1x32xf32, #tpu.memory_space<vmem>>, vector<1x32xf32>
    %178 = vector.broadcast %177 : vector<1x32xf32> to vector<8x32xf32>
    %179 = arith.addf %176, %178 : vector<8x32xf32>
    %180 = arith.truncf %179 : vector<8x32xf32> to vector<8x32xbf16>
    %c0_79 = arith.constant 0 : index
    %c0_80 = arith.constant 0 : index
    %181 = vector.load %arg10[%c0_79, %c0_80] : memref<32x128xbf16, #tpu.memory_space<vmem>>, vector<32x128xbf16>
    %cst_81 = arith.constant dense<0.000000e+00> : vector<8x128xf32>
    %182 = tpu.matmul %180, %181, %cst_81 {dimension_numbers = #tpu.dot_dimension_numbers<[1], [0], [0], [1], [0, 0, 1, 1], [], []>} : vector<8x32xbf16>, vector<32x128xbf16>, vector<8x128xf32> -> vector<8x128xf32>
    %c0_82 = arith.constant 0 : index
    %c0_83 = arith.constant 0 : index
    %183 = vector.load %arg11[%c0_82, %c0_83] : memref<1x128xf32, #tpu.memory_space<vmem>>, vector<1x128xf32>
    %184 = vector.broadcast %183 : vector<1x128xf32> to vector<8x128xf32>
    %185 = arith.addf %182, %184 : vector<8x128xf32>
    %cst_84 = arith.constant 5.000000e-01 : f32
    %186 = vector.broadcast %cst_84 : f32 to vector<8x128xf32>
    %187 = arith.mulf %186, %185 : vector<8x128xf32>
    %cst_85 = arith.constant 4.471500e-02 : f32
    %188 = vector.broadcast %cst_85 : f32 to vector<8x128xf32>
    %189 = arith.mulf %188, %185 : vector<8x128xf32>
    %190 = arith.mulf %189, %185 : vector<8x128xf32>
    %191 = arith.mulf %190, %185 : vector<8x128xf32>
    %192 = arith.addf %185, %191 : vector<8x128xf32>
    %cst_86 = arith.constant 0.797884583 : f32
    %193 = vector.broadcast %cst_86 : f32 to vector<8x128xf32>
    %194 = arith.mulf %193, %192 : vector<8x128xf32>
    %195 = math.tanh %194 : vector<8x128xf32>
    %cst_87 = arith.constant 1.000000e+00 : f32
    %196 = vector.broadcast %cst_87 : f32 to vector<8x128xf32>
    %197 = arith.addf %196, %195 : vector<8x128xf32>
    %198 = arith.mulf %187, %197 : vector<8x128xf32>
    %199 = arith.truncf %198 : vector<8x128xf32> to vector<8x128xbf16>
    %c0_88 = arith.constant 0 : index
    %c0_89 = arith.constant 0 : index
    %200 = vector.load %arg12[%c0_88, %c0_89] : memref<128x32xbf16, #tpu.memory_space<vmem>>, vector<128x32xbf16>
    %cst_90 = arith.constant dense<0.000000e+00> : vector<8x32xf32>
    %201 = tpu.matmul %199, %200, %cst_90 {dimension_numbers = #tpu.dot_dimension_numbers<[1], [0], [0], [1], [0, 0, 1, 1], [], []>} : vector<8x128xbf16>, vector<128x32xbf16>, vector<8x32xf32> -> vector<8x32xf32>
    %c0_91 = arith.constant 0 : index
    %c0_92 = arith.constant 0 : index
    %202 = vector.load %arg13[%c0_91, %c0_92] : memref<1x32xf32, #tpu.memory_space<vmem>>, vector<1x32xf32>
    %203 = vector.broadcast %202 : vector<1x32xf32> to vector<8x32xf32>
    %204 = arith.addf %201, %203 : vector<8x32xf32>
    %205 = arith.addf %155, %204 : vector<8x32xf32>
    %206 = vector.extract_strided_slice %205 {offsets = [0, 0], sizes = [1, 32], strides = [1, 1]} : vector<8x32xf32> to vector<1x32xf32>
    %207 = vector.shape_cast %206 : vector<1x32xf32> to vector<1x1x32xf32>
    %c0_93 = arith.constant 0 : index
    %c0_94 = arith.constant 0 : index
    %c0_95 = arith.constant 0 : index
    %208 = vector.load %arg14[%c0_93, %c0_94, %c0_95] : memref<1x1x256xf32, #tpu.memory_space<vmem>>, vector<1x1x32xf32>
    tpu.vector_store %arg14[%c0_93, %c0_94, %c0_95], %207 {strides = array<i32>} : memref<1x1x256xf32, #tpu.memory_space<vmem>>, vector<1x1x32xf32>,
    %209 = vector.extract_strided_slice %205 {offsets = [1, 0], sizes = [1, 32], strides = [1, 1]} : vector<8x32xf32> to vector<1x32xf32>
    %210 = vector.shape_cast %209 : vector<1x32xf32> to vector<1x1x32xf32>
    %c0_96 = arith.constant 0 : index
    %c0_97 = arith.constant 0 : index
    %c32_98 = arith.constant 32 : index
    %211 = vector.load %arg14[%c0_96, %c0_97, %c32_98] : memref<1x1x256xf32, #tpu.memory_space<vmem>>, vector<1x1x32xf32>
    tpu.vector_store %arg14[%c0_96, %c0_97, %c32_98], %210 {strides = array<i32>} : memref<1x1x256xf32, #tpu.memory_space<vmem>>, vector<1x1x32xf32>,
    %212 = vector.extract_strided_slice %205 {offsets = [2, 0], sizes = [1, 32], strides = [1, 1]} : vector<8x32xf32> to vector<1x32xf32>
    %213 = vector.shape_cast %212 : vector<1x32xf32> to vector<1x1x32xf32>
    %c0_99 = arith.constant 0 : index
    %c0_100 = arith.constant 0 : index
    %c64_101 = arith.constant 64 : index
    %214 = vector.load %arg14[%c0_99, %c0_100, %c64_101] : memref<1x1x256xf32, #tpu.memory_space<vmem>>, vector<1x1x32xf32>
    tpu.vector_store %arg14[%c0_99, %c0_100, %c64_101], %213 {strides = array<i32>} : memref<1x1x256xf32, #tpu.memory_space<vmem>>, vector<1x1x32xf32>,
    %215 = vector.extract_strided_slice %205 {offsets = [3, 0], sizes = [1, 32], strides = [1, 1]} : vector<8x32xf32> to vector<1x32xf32>
    %216 = vector.shape_cast %215 : vector<1x32xf32> to vector<1x1x32xf32>
    %c0_102 = arith.constant 0 : index
    %c0_103 = arith.constant 0 : index
    %c96_104 = arith.constant 96 : index
    %217 = vector.load %arg14[%c0_102, %c0_103, %c96_104] : memref<1x1x256xf32, #tpu.memory_space<vmem>>, vector<1x1x32xf32>
    tpu.vector_store %arg14[%c0_102, %c0_103, %c96_104], %216 {strides = array<i32>} : memref<1x1x256xf32, #tpu.memory_space<vmem>>, vector<1x1x32xf32>,
    %218 = vector.extract_strided_slice %205 {offsets = [4, 0], sizes = [1, 32], strides = [1, 1]} : vector<8x32xf32> to vector<1x32xf32>
    %219 = vector.shape_cast %218 : vector<1x32xf32> to vector<1x1x32xf32>
    %c0_105 = arith.constant 0 : index
    %c0_106 = arith.constant 0 : index
    %c128_107 = arith.constant 128 : index
    %220 = vector.load %arg14[%c0_105, %c0_106, %c128_107] : memref<1x1x256xf32, #tpu.memory_space<vmem>>, vector<1x1x32xf32>
    tpu.vector_store %arg14[%c0_105, %c0_106, %c128_107], %219 {strides = array<i32>} : memref<1x1x256xf32, #tpu.memory_space<vmem>>, vector<1x1x32xf32>,
    %221 = vector.extract_strided_slice %205 {offsets = [5, 0], sizes = [1, 32], strides = [1, 1]} : vector<8x32xf32> to vector<1x32xf32>
    %222 = vector.shape_cast %221 : vector<1x32xf32> to vector<1x1x32xf32>
    %c0_108 = arith.constant 0 : index
    %c0_109 = arith.constant 0 : index
    %c160_110 = arith.constant 160 : index
    %223 = vector.load %arg14[%c0_108, %c0_109, %c160_110] : memref<1x1x256xf32, #tpu.memory_space<vmem>>, vector<1x1x32xf32>
    tpu.vector_store %arg14[%c0_108, %c0_109, %c160_110], %222 {strides = array<i32>} : memref<1x1x256xf32, #tpu.memory_space<vmem>>, vector<1x1x32xf32>,
    %224 = vector.extract_strided_slice %205 {offsets = [6, 0], sizes = [1, 32], strides = [1, 1]} : vector<8x32xf32> to vector<1x32xf32>
    %225 = vector.shape_cast %224 : vector<1x32xf32> to vector<1x1x32xf32>
    %c0_111 = arith.constant 0 : index
    %c0_112 = arith.constant 0 : index
    %c192_113 = arith.constant 192 : index
    %226 = vector.load %arg14[%c0_111, %c0_112, %c192_113] : memref<1x1x256xf32, #tpu.memory_space<vmem>>, vector<1x1x32xf32>
    tpu.vector_store %arg14[%c0_111, %c0_112, %c192_113], %225 {strides = array<i32>} : memref<1x1x256xf32, #tpu.memory_space<vmem>>, vector<1x1x32xf32>,
    %227 = vector.extract_strided_slice %205 {offsets = [7, 0], sizes = [1, 32], strides = [1, 1]} : vector<8x32xf32> to vector<1x32xf32>
    %228 = vector.shape_cast %227 : vector<1x32xf32> to vector<1x1x32xf32>
    %c0_114 = arith.constant 0 : index
    %c0_115 = arith.constant 0 : index
    %c224_116 = arith.constant 224 : index
    %229 = vector.load %arg14[%c0_114, %c0_115, %c224_116] : memref<1x1x256xf32, #tpu.memory_space<vmem>>, vector<1x1x32xf32>
    tpu.vector_store %arg14[%c0_114, %c0_115, %c224_116], %228 {strides = array<i32>} : memref<1x1x256xf32, #tpu.memory_space<vmem>>, vector<1x1x32xf32>,
    return
  }
  func.func @transform_0(%arg0: i32) -> (i32, i32, i32) {
    %c0_i32 = arith.constant 0 : i32
    %c0_i32_0 = arith.constant 0 : i32
    %c0_i32_1 = arith.constant 0 : i32
    return %arg0, %c0_i32, %c0_i32_0 : i32, i32, i32
  }
  func.func @transform_1(%arg0: i32) -> (i32, i32) {
    %c0_i32 = arith.constant 0 : i32
    %c0_i32_0 = arith.constant 0 : i32
    %c0_i32_1 = arith.constant 0 : i32
    return %c0_i32, %c0_i32_0 : i32, i32
  }
  func.func @transform_2(%arg0: i32) -> (i32, i32) {
    %c0_i32 = arith.constant 0 : i32
    %c0_i32_0 = arith.constant 0 : i32
    %c0_i32_1 = arith.constant 0 : i32
    return %c0_i32, %c0_i32_0 : i32, i32
  }
  func.func @transform_3(%arg0: i32) -> (i32, i32) {
    %c0_i32 = arith.constant 0 : i32
    %c0_i32_0 = arith.constant 0 : i32
    %c0_i32_1 = arith.constant 0 : i32
    return %c0_i32, %c0_i32_0 : i32, i32
  }
  func.func @transform_4(%arg0: i32) -> (i32, i32) {
    %c0_i32 = arith.constant 0 : i32
    %c0_i32_0 = arith.constant 0 : i32
    %c0_i32_1 = arith.constant 0 : i32
    return %c0_i32, %c0_i32_0 : i32, i32
  }
  func.func @transform_5(%arg0: i32) -> (i32, i32) {
    %c0_i32 = arith.constant 0 : i32
    %c0_i32_0 = arith.constant 0 : i32
    %c0_i32_1 = arith.constant 0 : i32
    return %c0_i32, %c0_i32_0 : i32, i32
  }
  func.func @transform_6(%arg0: i32) -> (i32, i32) {
    %c0_i32 = arith.constant 0 : i32
    %c0_i32_0 = arith.constant 0 : i32
    %c0_i32_1 = arith.constant 0 : i32
    return %c0_i32, %c0_i32_0 : i32, i32
  }
  func.func @transform_7(%arg0: i32) -> (i32, i32) {
    %c0_i32 = arith.constant 0 : i32
    %c0_i32_0 = arith.constant 0 : i32
    %c0_i32_1 = arith.constant 0 : i32
    return %c0_i32, %c0_i32_0 : i32, i32
  }
  func.func @transform_8(%arg0: i32) -> (i32, i32) {
    %c0_i32 = arith.constant 0 : i32
    %c0_i32_0 = arith.constant 0 : i32
    %c0_i32_1 = arith.constant 0 : i32
    return %c0_i32, %c0_i32_0 : i32, i32
  }
  func.func @transform_9(%arg0: i32) -> (i32, i32) {
    %c0_i32 = arith.constant 0 : i32
    %c0_i32_0 = arith.constant 0 : i32
    %c0_i32_1 = arith.constant 0 : i32
    return %c0_i32, %c0_i32_0 : i32, i32
  }
  func.func @transform_10(%arg0: i32) -> (i32, i32) {
    %c0_i32 = arith.constant 0 : i32
    %c0_i32_0 = arith.constant 0 : i32
    %c0_i32_1 = arith.constant 0 : i32
    return %c0_i32, %c0_i32_0 : i32, i32
  }
  func.func @transform_11(%arg0: i32) -> (i32, i32) {
    %c0_i32 = arith.constant 0 : i32
    %c0_i32_0 = arith.constant 0 : i32
    %c0_i32_1 = arith.constant 0 : i32
    return %c0_i32, %c0_i32_0 : i32, i32
  }
  func.func @transform_12(%arg0: i32) -> (i32, i32) {
    %c0_i32 = arith.constant 0 : i32
    %c0_i32_0 = arith.constant 0 : i32
    %c0_i32_1 = arith.constant 0 : i32
    return %c0_i32, %c0_i32_0 : i32, i32
  }
  func.func @transform_13(%arg0: i32) -> (i32, i32, i32) {
    %c0_i32 = arith.constant 0 : i32
    %c0_i32_0 = arith.constant 0 : i32
    %c0_i32_1 = arith.constant 0 : i32
    return %arg0, %c0_i32, %c0_i32_0 : i32, i32, i32
  }
}

</mosaic_0001>

<llo_original>
// kernel: tpu_custom_call.1
$region0: #{tpu_custom_call.1}
  #allocation0 [shape = 'u32[]', space=smem, size = 0x4, offset = 0x4, fixed_abs, tag = 'smem constant byte address 0x4 - core index']
  #allocation1 [shape = 'u32[72,128]{1,0:T(1,128)}', space=vmem, size = 0x9000, scoped, tag = 'internal scratch']
  #allocation2 [shape = 'f32[8,32]{1,0:T(8,128)}', space=vmem, size = 0x1000, scoped, tag = 'scratch operand']
  #allocation3 [shape = 'f32[8,32]{1,0:T(8,128)}', space=vmem, size = 0x1000, scoped, tag = 'scratch operand']
  %s0 = inlined_call_operand.vmem [shape: f32[2,1,256], index: 0, kind: input, shape index: {}]
  %s1 = inlined_call_operand.vmem [shape: f32[1,32], index: 1, kind: input, shape index: {}]
  %s2 = inlined_call_operand.vmem [shape: f32[1,32], index: 2, kind: input, shape index: {}]
  %s3 = inlined_call_operand.vmem [shape: bf16[32,96], index: 3, kind: input, shape index: {}]
  %s4 = inlined_call_operand.vmem [shape: f32[1,96], index: 4, kind: input, shape index: {}]
  %s5 = inlined_call_operand.vmem [shape: bf16[32,32], index: 5, kind: input, shape index: {}]
  %s6 = inlined_call_operand.vmem [shape: f32[1,32], index: 6, kind: input, shape index: {}]
  %s7 = inlined_call_operand.vmem [shape: f32[1,32], index: 7, kind: input, shape index: {}]
  %s8 = inlined_call_operand.vmem [shape: f32[1,32], index: 8, kind: input, shape index: {}]
  %s9 = inlined_call_operand.vmem [shape: bf16[32,128], index: 9, kind: input, shape index: {}]
  %s10 = inlined_call_operand.vmem [shape: f32[1,128], index: 10, kind: input, shape index: {}]
  %s11 = inlined_call_operand.vmem [shape: bf16[128,32], index: 11, kind: input, shape index: {}]
  %s12 = inlined_call_operand.vmem [shape: f32[1,32], index: 12, kind: input, shape index: {}]
  %s13 = inlined_call_operand.hbm [shape: f32[2,1,256], index: 13, kind: output, shape index: {}]
  %s14 = sld [smem:[#allocation0]]
  $region85: #{tpu_custom_call.1} parent=0
    _
  %s16 = ssub.s32 1, %s14
  %s17 = scalar_select 0, %s16, %s14
  $region1: #{tpu_custom_call.1} parent=0
    #allocation4 [shape = 'u8[2048]{0}', space=vmem, size = 0x800, scoped, tag = 'output window, operand 0']
    #allocation5 [shape = 's32[2]{0}', space=sflag, size = 0x8, scoped, tag = 'scoped memory for tpu_custom_call.1']
    %18 = vsyncpa [#allocation5], 0
    %s19 = scalar_lea.sflag [#allocation5], 1
    %20 = vsyncpa %s19, 0
    loop: start=0, step=1, limit=4
    $region2: #{tpu_custom_call.1} parent=1 // loop_pre_header
      _
    $region3: #{tpu_custom_call.1} parent=1 // loop_header
      %s22 = sphi 0, %s26
      %p23 = scmp.ge.s32.totalorder %s22, 4
      %s32 = sphi 0, %s34
      %s35 = sphi 0, %s32
      %s36 = sphi 0, %s35
      %s52 = sphi 0, %s36
      %s56 = sphi 0, %s56
      %s58 = sphi 0, %s56
      %s59 = sphi 0, %s58
      %s73 = sphi 0, %s59
      %s77 = sphi 0, %s77
      %s79 = sphi 0, %s77
      %s80 = sphi 0, %s79
      %s94 = sphi 0, %s80
      %s98 = sphi 0, %s98
      %s100 = sphi 0, %s98
      %s101 = sphi 0, %s100
      %s115 = sphi 0, %s101
      %s119 = sphi 0, %s119
      %s121 = sphi 0, %s119
      %s122 = sphi 0, %s121
      %s136 = sphi 0, %s122
      %s140 = sphi 0, %s140
      %s142 = sphi 0, %s140
      %s143 = sphi 0, %s142
      %s157 = sphi 0, %s143
      %s161 = sphi 0, %s161
      %s163 = sphi 0, %s161
      %s164 = sphi 0, %s163
      %s178 = sphi 0, %s164
      %s182 = sphi 0, %s182
      %s184 = sphi 0, %s182
      %s185 = sphi 0, %s184
      %s199 = sphi 0, %s185
      %s203 = sphi 0, %s203
      %s205 = sphi 0, %s203
      %s206 = sphi 0, %s205
      %s220 = sphi 0, %s206
      %s224 = sphi 0, %s224
      %s226 = sphi 0, %s224
      %s227 = sphi 0, %s226
      %s241 = sphi 0, %s227
      %s245 = sphi 0, %s245
      %s247 = sphi 0, %s245
      %s248 = sphi 0, %s247
      %s262 = sphi 0, %s248
      %s266 = sphi 0, %s266
      %s268 = sphi 0, %s266
      %s269 = sphi 0, %s268
      %s283 = sphi 0, %s269
      %s287 = sphi 0, %s287
      %s289 = sphi 0, %s287
      %s290 = sphi 0, %s289
      %s304 = sphi 0, %s290
      %s310 = sphi 0, %s312
      %s313 = sphi 0, %s310
      %s314 = sphi 0, %s313
      %s330 = sphi 0, %s314
    $region4: #{tpu_custom_call.1} parent=1 // loop_header_branch
      %25 = sbr.rel (%p23) target = $region8
    $region5: #{tpu_custom_call.1} parent=1 // loop_body
      %s27 = ssub.s32 %s22, 1
      %s28 = ssub.s32 %s22, 2
      %s29 = sadd.s32 %s22, 1
      %s30 = ssub.s32 %s22, %s29
      %p31 = scmp.eq.s32.totalorder %s30, 0
      %s33 = sadd.s32 %s32, 1
      %s34 = scalar_select %p31, %s32, %s33
      %p37 = pneg %p31
      %p38 = scmp.eq.s32.totalorder %s22, 1
      %p39 = por %p37, %p38
      %p40 = scmp.ne.s32.totalorder %s32, %s35
      %p41 = scmp.eq.s32.totalorder %s22, 0
      %p42 = por %p40, %p41
      %p43 = scmp.ne.s32.totalorder %s32, %s35
      %p44 = scmp.eq.s32.totalorder %s27, 1
      %p45 = por %p43, %p44
      %p46 = scmp.ne.s32.totalorder %s35, %s36
      %p47 = scmp.eq.s32.totalorder %s27, 0
      %p48 = por %p46, %p47
      %p49 = scmp.ne.s32.totalorder %s35, %s36
      %p50 = scmp.eq.s32.totalorder %s28, 1
      %p51 = por %p49, %p50
      %p53 = scmp.ne.s32.totalorder %s36, %s52
      %p54 = scmp.eq.s32.totalorder %s28, 0
      %p55 = por %p53, %p54
      %s57 = sadd.s32 %s56, 1
      %p60 = scmp.eq.s32.totalorder %s22, 1
      %p61 = scmp.ne.s32.totalorder %s56, %s58
      %p62 = scmp.eq.s32.totalorder %s22, 0
      %p63 = por %p61, %p62
      %p64 = scmp.ne.s32.totalorder %s56, %s58
      %p65 = scmp.eq.s32.totalorder %s27, 1
      %p66 = por %p64, %p65
      %p67 = scmp.ne.s32.totalorder %s58, %s59
      %p68 = scmp.eq.s32.totalorder %s27, 0
      %p69 = por %p67, %p68
      %p70 = scmp.ne.s32.totalorder %s58, %s59
      %p71 = scmp.eq.s32.totalorder %s28, 1
      %p72 = por %p70, %p71
      %p74 = scmp.ne.s32.totalorder %s59, %s73
      %p75 = scmp.eq.s32.totalorder %s28, 0
      %p76 = por %p74, %p75
      %s78 = sadd.s32 %s77, 1
      %p81 = scmp.eq.s32.totalorder %s22, 1
      %p82 = scmp.ne.s32.totalorder %s77, %s79
      %p83 = scmp.eq.s32.totalorder %s22, 0
      %p84 = por %p82, %p83
      %p85 = scmp.ne.s32.totalorder %s77, %s79
      %p86 = scmp.eq.s32.totalorder %s27, 1
      %p87 = por %p85, %p86
      %p88 = scmp.ne.s32.totalorder %s79, %s80
      %p89 = scmp.eq.s32.totalorder %s27, 0
      %p90 = por %p88, %p89
      %p91 = scmp.ne.s32.totalorder %s79, %s80
      %p92 = scmp.eq.s32.totalorder %s28, 1
      %p93 = por %p91, %p92
      %p95 = scmp.ne.s32.totalorder %s80, %s94
      %p96 = scmp.eq.s32.totalorder %s28, 0
      %p97 = por %p95, %p96
      %s99 = sadd.s32 %s98, 1
      %p102 = scmp.eq.s32.totalorder %s22, 1
      %p103 = scmp.ne.s32.totalorder %s98, %s100
      %p104 = scmp.eq.s32.totalorder %s22, 0
      %p105 = por %p103, %p104
      %p106 = scmp.ne.s32.totalorder %s98, %s100
      %p107 = scmp.eq.s32.totalorder %s27, 1
      %p108 = por %p106, %p107
      %p109 = scmp.ne.s32.totalorder %s100, %s101
      %p110 = scmp.eq.s32.totalorder %s27, 0
      %p111 = por %p109, %p110
      %p112 = scmp.ne.s32.totalorder %s100, %s101
      %p113 = scmp.eq.s32.totalorder %s28, 1
      %p114 = por %p112, %p113
      %p116 = scmp.ne.s32.totalorder %s101, %s115
      %p117 = scmp.eq.s32.totalorder %s28, 0
      %p118 = por %p116, %p117
      %s120 = sadd.s32 %s119, 1
      %p123 = scmp.eq.s32.totalorder %s22, 1
      %p124 = scmp.ne.s32.totalorder %s119, %s121
      %p125 = scmp.eq.s32.totalorder %s22, 0
      %p126 = por %p124, %p125
      %p127 = scmp.ne.s32.totalorder %s119, %s121
      %p128 = scmp.eq.s32.totalorder %s27, 1
      %p129 = por %p127, %p128
      %p130 = scmp.ne.s32.totalorder %s121, %s122
      %p131 = scmp.eq.s32.totalorder %s27, 0
      %p132 = por %p130, %p131
      %p133 = scmp.ne.s32.totalorder %s121, %s122
      %p134 = scmp.eq.s32.totalorder %s28, 1
      %p135 = por %p133, %p134
      %p137 = scmp.ne.s32.totalorder %s122, %s136
      %p138 = scmp.eq.s32.totalorder %s28, 0
      %p139 = por %p137, %p138
      %s141 = sadd.s32 %s140, 1
      %p144 = scmp.eq.s32.totalorder %s22, 1
      %p145 = scmp.ne.s32.totalorder %s140, %s142
      %p146 = scmp.eq.s32.totalorder %s22, 0
      %p147 = por %p145, %p146
      %p148 = scmp.ne.s32.totalorder %s140, %s142
      %p149 = scmp.eq.s32.totalorder %s27, 1
      %p150 = por %p148, %p149
      %p151 = scmp.ne.s32.totalorder %s142, %s143
      %p152 = scmp.eq.s32.totalorder %s27, 0
      %p153 = por %p151, %p152
      %p154 = scmp.ne.s32.totalorder %s142, %s143
      %p155 = scmp.eq.s32.totalorder %s28, 1
      %p156 = por %p154, %p155
      %p158 = scmp.ne.s32.totalorder %s143, %s157
      %p159 = scmp.eq.s32.totalorder %s28, 0
      %p160 = por %p158, %p159
      %s162 = sadd.s32 %s161, 1
      %p165 = scmp.eq.s32.totalorder %s22, 1
      %p166 = scmp.ne.s32.totalorder %s161, %s163
      %p167 = scmp.eq.s32.totalorder %s22, 0
      %p168 = por %p166, %p167
      %p169 = scmp.ne.s32.totalorder %s161, %s163
      %p170 = scmp.eq.s32.totalorder %s27, 1
      %p171 = por %p169, %p170
      %p172 = scmp.ne.s32.totalorder %s163, %s164
      %p173 = scmp.eq.s32.totalorder %s27, 0
      %p174 = por %p172, %p173
      %p175 = scmp.ne.s32.totalorder %s163, %s164
      %p176 = scmp.eq.s32.totalorder %s28, 1
      %p177 = por %p175, %p176
      %p179 = scmp.ne.s32.totalorder %s164, %s178
      %p180 = scmp.eq.s32.totalorder %s28, 0
      %p181 = por %p179, %p180
      %s183 = sadd.s32 %s182, 1
      %p186 = scmp.eq.s32.totalorder %s22, 1
      %p187 = scmp.ne.s32.totalorder %s182, %s184
      %p188 = scmp.eq.s32.totalorder %s22, 0
      %p189 = por %p187, %p188
      %p190 = scmp.ne.s32.totalorder %s182, %s184
      %p191 = scmp.eq.s32.totalorder %s27, 1
      %p192 = por %p190, %p191
      %p193 = scmp.ne.s32.totalorder %s184, %s185
      %p194 = scmp.eq.s32.totalorder %s27, 0
      %p195 = por %p193, %p194
      %p196 = scmp.ne.s32.totalorder %s184, %s185
      %p197 = scmp.eq.s32.totalorder %s28, 1
      %p198 = por %p196, %p197
      %p200 = scmp.ne.s32.totalorder %s185, %s199
      %p201 = scmp.eq.s32.totalorder %s28, 0
      %p202 = por %p200, %p201
      %s204 = sadd.s32 %s203, 1
      %p207 = scmp.eq.s32.totalorder %s22, 1
      %p208 = scmp.ne.s32.totalorder %s203, %s205
      %p209 = scmp.eq.s32.totalorder %s22, 0
      %p210 = por %p208, %p209
      %p211 = scmp.ne.s32.totalorder %s203, %s205
      %p212 = scmp.eq.s32.totalorder %s27, 1
      %p213 = por %p211, %p212
      %p214 = scmp.ne.s32.totalorder %s205, %s206
      %p215 = scmp.eq.s32.totalorder %s27, 0
      %p216 = por %p214, %p215
      %p217 = scmp.ne.s32.totalorder %s205, %s206
      %p218 = scmp.eq.s32.totalorder %s28, 1
      %p219 = por %p217, %p218
      %p221 = scmp.ne.s32.totalorder %s206, %s220
      %p222 = scmp.eq.s32.totalorder %s28, 0
      %p223 = por %p221, %p222
      %s225 = sadd.s32 %s224, 1
      %p228 = scmp.eq.s32.totalorder %s22, 1
      %p229 = scmp.ne.s32.totalorder %s224, %s226
      %p230 = scmp.eq.s32.totalorder %s22, 0
      %p231 = por %p229, %p230
      %p232 = scmp.ne.s32.totalorder %s224, %s226
      %p233 = scmp.eq.s32.totalorder %s27, 1
      %p234 = por %p232, %p233
      %p235 = scmp.ne.s32.totalorder %s226, %s227
      %p236 = scmp.eq.s32.totalorder %s27, 0
      %p237 = por %p235, %p236
      %p238 = scmp.ne.s32.totalorder %s226, %s227
      %p239 = scmp.eq.s32.totalorder %s28, 1
      %p240 = por %p238, %p239
      %p242 = scmp.ne.s32.totalorder %s227, %s241
      %p243 = scmp.eq.s32.totalorder %s28, 0
      %p244 = por %p242, %p243
      %s246 = sadd.s32 %s245, 1
      %p249 = scmp.eq.s32.totalorder %s22, 1
      %p250 = scmp.ne.s32.totalorder %s245, %s247
      %p251 = scmp.eq.s32.totalorder %s22, 0
      %p252 = por %p250, %p251
      %p253 = scmp.ne.s32.totalorder %s245, %s247
      %p254 = scmp.eq.s32.totalorder %s27, 1
      %p255 = por %p253, %p254
      %p256 = scmp.ne.s32.totalorder %s247, %s248
      %p257 = scmp.eq.s32.totalorder %s27, 0
      %p258 = por %p256, %p257
      %p259 = scmp.ne.s32.totalorder %s247, %s248
      %p260 = scmp.eq.s32.totalorder %s28, 1
      %p261 = por %p259, %p260
      %p263 = scmp.ne.s32.totalorder %s248, %s262
      %p264 = scmp.eq.s32.totalorder %s28, 0
      %p265 = por %p263, %p264
      %s267 = sadd.s32 %s266, 1
      %p270 = scmp.eq.s32.totalorder %s22, 1
      %p271 = scmp.ne.s32.totalorder %s266, %s268
      %p272 = scmp.eq.s32.totalorder %s22, 0
      %p273 = por %p271, %p272
      %p274 = scmp.ne.s32.totalorder %s266, %s268
      %p275 = scmp.eq.s32.totalorder %s27, 1
      %p276 = por %p274, %p275
      %p277 = scmp.ne.s32.totalorder %s268, %s269
      %p278 = scmp.eq.s32.totalorder %s27, 0
      %p279 = por %p277, %p278
      %p280 = scmp.ne.s32.totalorder %s268, %s269
      %p281 = scmp.eq.s32.totalorder %s28, 1
      %p282 = por %p280, %p281
      %p284 = scmp.ne.s32.totalorder %s269, %s283
      %p285 = scmp.eq.s32.totalorder %s28, 0
      %p286 = por %p284, %p285
      %s288 = sadd.s32 %s287, 1
      %p291 = scmp.eq.s32.totalorder %s22, 1
      %p292 = scmp.ne.s32.totalorder %s287, %s289
      %p293 = scmp.eq.s32.totalorder %s22, 0
      %p294 = por %p292, %p293
      %p295 = scmp.ne.s32.totalorder %s287, %s289
      %p296 = scmp.eq.s32.totalorder %s27, 1
      %p297 = por %p295, %p296
      %p298 = scmp.ne.s32.totalorder %s289, %s290
      %p299 = scmp.eq.s32.totalorder %s27, 0
      %p300 = por %p298, %p299
      %p301 = scmp.ne.s32.totalorder %s289, %s290
      %p302 = scmp.eq.s32.totalorder %s28, 1
      %p303 = por %p301, %p302
      %p305 = scmp.ne.s32.totalorder %s290, %s304
      %p306 = scmp.eq.s32.totalorder %s28, 0
      %p307 = por %p305, %p306
      %s308 = ssub.s32 %s22, %s29
      %p309 = scmp.eq.s32.totalorder %s308, 0
      %s311 = sadd.s32 %s310, 1
      %s312 = scalar_select %p309, %s310, %s311
      %p315 = pneg %p309
      %p316 = scmp.eq.s32.totalorder %s22, 1
      %p317 = por %p315, %p316
      %p318 = scmp.ne.s32.totalorder %s310, %s313
      %p319 = scmp.eq.s32.totalorder %s22, 0
      %p320 = por %p318, %p319
      %p321 = scmp.ne.s32.totalorder %s310, %s313
      %p322 = scmp.eq.s32.totalorder %s27, 1
      %p323 = por %p321, %p322
      %p324 = scmp.ne.s32.totalorder %s313, %s314
      %p325 = scmp.eq.s32.totalorder %s27, 0
      %p326 = por %p324, %p325
      %p327 = scmp.ne.s32.totalorder %s313, %s314
      %p328 = scmp.eq.s32.totalorder %s28, 1
      %p329 = por %p327, %p328
      %p331 = scmp.ne.s32.totalorder %s314, %s330
      %p332 = scmp.eq.s32.totalorder %s28, 0
      %p333 = por %p331, %p332
      %p334 = scmp.le.s32.totalorder 1, %s22
      %p335 = scmp.lt.s32.totalorder %s22, 3
      %p336 = pnand %p334, %p335
      %p337 = pneg %p336
      // Predicated region
      $region9: #{tpu_custom_call.1} parent=5 // pred_check
        _
      $region10: #{tpu_custom_call.1} parent=5 // pred_check_branch
        %339 = sbr.rel (%p336) target = $region12
      $region11: #{tpu_custom_call.1} parent=5 // pred_region
        %s340 = ssub.s32 %s22, 1
        // Predicated region
        $region13: #{tpu_custom_call.1} parent=11 // pred_check
          %p341 = pneg %p69
        $region14: #{tpu_custom_call.1} parent=11 // pred_check_branch
          %343 = sbr.rel (%p341) target = $region16
        $region15: #{tpu_custom_call.1} parent=11 // pred_region
          _
        $region16: #{tpu_custom_call.1} parent=11 // pred_fallthru
          _
        // Predicated region
        $region17: #{tpu_custom_call.1} parent=11 // pred_check
          %p344 = pneg %p90
        $region18: #{tpu_custom_call.1} parent=11 // pred_check_branch
          %346 = sbr.rel (%p344) target = $region20
        $region19: #{tpu_custom_call.1} parent=11 // pred_region
          _
        $region20: #{tpu_custom_call.1} parent=11 // pred_fallthru
          _
        // Predicated region
        $region21: #{tpu_custom_call.1} parent=11 // pred_check
          %p347 = pneg %p111
        $region22: #{tpu_custom_call.1} parent=11 // pred_check_branch
          %349 = sbr.rel (%p347) target = $region24
        $region23: #{tpu_custom_call.1} parent=11 // pred_region
          _
        $region24: #{tpu_custom_call.1} parent=11 // pred_fallthru
          _
        // Predicated region
        $region25: #{tpu_custom_call.1} parent=11 // pred_check
          %p350 = pneg %p132
        $region26: #{tpu_custom_call.1} parent=11 // pred_check_branch
          %352 = sbr.rel (%p350) target = $region28
        $region27: #{tpu_custom_call.1} parent=11 // pred_region
          _
        $region28: #{tpu_custom_call.1} parent=11 // pred_fallthru
          _
        // Predicated region
        $region29: #{tpu_custom_call.1} parent=11 // pred_check
          %p353 = pneg %p153
        $region30: #{tpu_custom_call.1} parent=11 // pred_check_branch
          %355 = sbr.rel (%p353) target = $region32
        $region31: #{tpu_custom_call.1} parent=11 // pred_region
          _
        $region32: #{tpu_custom_call.1} parent=11 // pred_fallthru
          _
        // Predicated region
        $region33: #{tpu_custom_call.1} parent=11 // pred_check
          %p356 = pneg %p174
        $region34: #{tpu_custom_call.1} parent=11 // pred_check_branch
          %358 = sbr.rel (%p356) target = $region36
        $region35: #{tpu_custom_call.1} parent=11 // pred_region
          _
        $region36: #{tpu_custom_call.1} parent=11 // pred_fallthru
          _
        // Predicated region
        $region37: #{tpu_custom_call.1} parent=11 // pred_check
          %p359 = pneg %p195
        $region38: #{tpu_custom_call.1} parent=11 // pred_check_branch
          %361 = sbr.rel (%p359) target = $region40
        $region39: #{tpu_custom_call.1} parent=11 // pred_region
          _
        $region40: #{tpu_custom_call.1} parent=11 // pred_fallthru
          _
        // Predicated region
        $region41: #{tpu_custom_call.1} parent=11 // pred_check
          %p362 = pneg %p216
        $region42: #{tpu_custom_call.1} parent=11 // pred_check_branch
          %364 = sbr.rel (%p362) target = $region44
        $region43: #{tpu_custom_call.1} parent=11 // pred_region
          _
        $region44: #{tpu_custom_call.1} parent=11 // pred_fallthru
          _
        // Predicated region
        $region45: #{tpu_custom_call.1} parent=11 // pred_check
          %p365 = pneg %p237
        $region46: #{tpu_custom_call.1} parent=11 // pred_check_branch
          %367 = sbr.rel (%p365) target = $region48
        $region47: #{tpu_custom_call.1} parent=11 // pred_region
          _
        $region48: #{tpu_custom_call.1} parent=11 // pred_fallthru
          _
        // Predicated region
        $region49: #{tpu_custom_call.1} parent=11 // pred_check
          %p368 = pneg %p258
        $region50: #{tpu_custom_call.1} parent=11 // pred_check_branch
          %370 = sbr.rel (%p368) target = $region52
        $region51: #{tpu_custom_call.1} parent=11 // pred_region
          _
        $region52: #{tpu_custom_call.1} parent=11 // pred_fallthru
          _
        // Predicated region
        $region53: #{tpu_custom_call.1} parent=11 // pred_check
          %p371 = pneg %p279
        $region54: #{tpu_custom_call.1} parent=11 // pred_check_branch
          %373 = sbr.rel (%p371) target = $region56
        $region55: #{tpu_custom_call.1} parent=11 // pred_region
          _
        $region56: #{tpu_custom_call.1} parent=11 // pred_fallthru
          _
        // Predicated region
        $region57: #{tpu_custom_call.1} parent=11 // pred_check
          %p374 = pneg %p300
        $region58: #{tpu_custom_call.1} parent=11 // pred_check_branch
          %376 = sbr.rel (%p374) target = $region60
        $region59: #{tpu_custom_call.1} parent=11 // pred_region
          _
        $region60: #{tpu_custom_call.1} parent=11 // pred_fallthru
          _
      $region12: #{tpu_custom_call.1} parent=5 // pred_fallthru
        _
      %p377 = scmp.lt.s32.totalorder %s22, 2
      // Predicated region
      $region61: #{tpu_custom_call.1} parent=5 // pred_check
        %p378 = pneg %p377
      $region62: #{tpu_custom_call.1} parent=5 // pred_check_branch
        %380 = sbr.rel (%p378) target = $region64
      $region63: #{tpu_custom_call.1} parent=5 // pred_region
        // Predicated region
        $region65: #{tpu_custom_call.1} parent=63 // pred_check
          %p381 = pneg %p42
        $region66: #{tpu_custom_call.1} parent=63 // pred_check_branch
          %383 = sbr.rel (%p381) target = $region68
        $region67: #{tpu_custom_call.1} parent=63 // pred_region
          %p384 = scmp.lt.s32.totalorder %s22, 1
          %s385 = scalar_select %p384, %s22, 1
          %s386 = smul.addr %s385, 2
          %s387 = scalar_lea.vmem %s0, %s386
        $region68: #{tpu_custom_call.1} parent=63 // pred_fallthru
          _
      $region64: #{tpu_custom_call.1} parent=5 // pred_fallthru
        _
      %p388 = scmp.le.s32.totalorder 1, %s22
      %p389 = scmp.lt.s32.totalorder %s22, 3
      %p390 = pnand %p388, %p389
      %p391 = pneg %p390
      // Predicated region
      $region69: #{tpu_custom_call.1} parent=5 // pred_check
        _
      $region70: #{tpu_custom_call.1} parent=5 // pred_check_branch
        %393 = sbr.rel (%p390) target = $region72
      $region71: #{tpu_custom_call.1} parent=5 // pred_region
        %s394 = ssub.s32 %s22, 1
        %p395 = scmp.lt.s32.totalorder %s27, 1
        %s396 = scalar_select %p395, %s27, 1
        %s397 = smul.addr %s396, 2
        %s398 = scalar_lea.vmem %s0, %s397
        %p399 = pneg %p48
        %p400 = pneg %p45
        %p401 = pneg %p69
        %p402 = pneg %p66
        %p403 = pneg %p90
        %p404 = pneg %p87
        %p405 = pneg %p111
        %p406 = pneg %p108
        %p407 = pneg %p132
        %p408 = pneg %p129
        %p409 = pneg %p153
        %p410 = pneg %p150
        %p411 = pneg %p174
        %p412 = pneg %p171
        %p413 = pneg %p195
        %p414 = pneg %p192
        %p415 = pneg %p216
        %p416 = pneg %p213
        %p417 = pneg %p237
        %p418 = pneg %p234
        %p419 = pneg %p258
        %p420 = pneg %p255
        %p421 = pneg %p279
        %p422 = pneg %p276
        %p423 = pneg %p300
        %p424 = pneg %p297
        %p425 = pneg %p326
        %p426 = pneg %p323
        %s427 = sand.u32 %s313, 1
        %s428 = scalar_lea.sflag [#allocation5], %s427
        %s429 = sand.u32 %s313, 1
        %s430 = smul.addr %s429, 2
        %s431 = scalar_lea.vmem [#allocation4], %s430
        %p432 = scmp.lt.s32.totalorder %s27, 1
        %s433 = scalar_select %p432, %s27, 1
        %s434 = smul.addr %s433, 2
        %s435 = scalar_lea.vmem %s0, %s434
        %v437 = vld [vmem:[%s435] sm:$0x1]
        %vm438 = vcmask 253952
        %439 = vst.msk [vmem:[#allocation2] sm:$0x1] %vm438, %v437
        %v440 = vld [vmem:[%s435] sm:$0x1]
        %v442 = vperm.slane %v440, 0
        %443 = vrot.lane.b32.xlu0 %v442, 96
        %v444 = vpop.permute.xlu0 %443
        %446 = vst.msk [vmem:[#allocation2 + $0x1] sm:$0x1] %vm438, %v444
        %v447 = vld [vmem:[%s435] sm:$0x1]
        %v449 = vperm.slane %v447, 0
        %450 = vrot.lane.b32.xlu0 %v449, 64
        %v451 = vpop.permute.xlu0 %450
        %453 = vst.msk [vmem:[#allocation2 + $0x2] sm:$0x1] %vm438, %v451
        %v454 = vld [vmem:[%s435] sm:$0x1]
        %v456 = vperm.slane %v454, 0
        %457 = vrot.lane.b32.xlu0 %v456, 32
        %v458 = vpop.permute.xlu0 %457
        %460 = vst.msk [vmem:[#allocation2 + $0x3] sm:$0x1] %vm438, %v458
        %v461 = vld [vmem:[%s435 + $0x1] sm:$0x1]
        %462 = vst.msk [vmem:[#allocation2 + $0x4] sm:$0x1] %vm438, %v461
        %v463 = vld [vmem:[%s435 + $0x1] sm:$0x1]
        %v465 = vperm.slane %v463, 0
        %466 = vrot.lane.b32.xlu0 %v465, 96
        %v467 = vpop.permute.xlu0 %466
        %469 = vst.msk [vmem:[#allocation2 + $0x5] sm:$0x1] %vm438, %v467
        %v470 = vld [vmem:[%s435 + $0x1] sm:$0x1]
        %v472 = vperm.slane %v470, 0
        %473 = vrot.lane.b32.xlu0 %v472, 64
        %v474 = vpop.permute.xlu0 %473
        %476 = vst.msk [vmem:[#allocation2 + $0x6] sm:$0x1] %vm438, %v474
        %v477 = vld [vmem:[%s435 + $0x1] sm:$0x1]
        %v479 = vperm.slane %v477, 0
        %480 = vrot.lane.b32.xlu0 %v479, 32
        %v481 = vpop.permute.xlu0 %480
        %483 = vst.msk [vmem:[#allocation2 + $0x7] sm:$0x1] %vm438, %v481
        %v484 = vld [vmem:[#allocation2] sm:$0xff]
        %vm485 = vcmask 261120
        %v486 = vsel %vm485, %v484, 0.0
        %487 = vadd.xlane.f32.xlu0 %v486
        %v488 = vpop.xlane.xlu0 %487
        %v489 = vmul.f32 %v488, 0.03125
        %v490 = vmul.f32 %v484, %v484
        %v491 = vsel %vm485, %v490, 0.0
        %492 = vadd.xlane.f32.xlu0 %v491
        %v493 = vpop.xlane.xlu0 %492
        %v494 = vmul.f32 %v493, 0.03125
        %v495 = vmul.f32 %v489, %v489
        %v496 = vsub.f32 %v494, %v495
        %v497 = vsub.f32 %v484, %v489
        %v498 = vadd.f32 %v496, 1e-05
        %v499 = vrsqrt.pop %v498
        %v500 = vmul.f32 %v499, %v498
        %v501 = vmul.f32 %v500, %v499
        %v502 = vmul.f32 0.5, %v501
        %v503 = vsub.f32 1.5, %v502
        %v504 = vmul.f32 %v499, %v503
        %vm505 = vweird.f32 %v498
        %vm506 = vweird.f32 %v499
        %vm507 = vmor %vm505, %vm506
        %v508 = vsel %vm507, %v499, %v504
        %v509 = vmul.f32 %v497, %v508
        %v510 = vld [vmem:[%s1] sm:$0x1]
        %v512 = vperm.slane %v510, 0
        %v514 = vmul.f32 %v509, %v512
        %v515 = vld [vmem:[%s2] sm:$0x1]
        %v517 = vperm.slane %v515, 0
        %v519 = vadd.f32 %v514, %v517
        %v520 = vpack.c.bf16 %v519, %v519
        %v521 = vld [vmem:[%s3] sm:$0xf]
        %v522 = vld [vmem:[%s3 + $0x4] sm:$0xf]
        %v523 = vld [vmem:[%s3 + $0x8] sm:$0xf]
        %v524 = vld [vmem:[%s3 + $0xc] sm:$0xf]
        %v525 = vld [vmem:[%s4] sm:$0x1]
        %v527 = vperm.slane %v525, 0
        %v533 = vunpack.c.l.b16 %v521
        %v534 = vunpack.c.l.b16 %v522
        %v535 = vunpack.c.l.b16 %v523
        %v536 = vunpack.c.l.b16 %v524
        %v537 = vpack.c.b16 %v534, %v533
        %v538 = vpack.c.b16 %v536, %v535
        %v542 = vsel %vm485, %v520, 0
        %544 = vmatpush.bf16.msra.mxu0 0
        %545 = vmatpush.bf16.msra.mxu0 0
        %546 = vmatpush.bf16.msra.mxu0 0
        %547 = vmatpush.bf16.msra.mxu0 0
        %548 = vmatpush.bf16.msra.mxu0 0
        %549 = vmatpush.bf16.msra.mxu0 0
        %550 = vmatpush.bf16.msra.mxu0 %v538
        %551 = vmatpush.bf16.msra.mxu0 %v537
        %552 = vmatmul.bf16.gmra.mxu0 %v542
        %v553 = vpop.f32.mrf.mxu0
        %v554 = vadd.f32 %v527, %v553
        %v555 = vpop.f32.mrf.mxu0
        %556 = vdwg.mxu0
        %v557 = vpack.c.bf16 %v554, %v554
        %559 = vrot.lane.b32.xlu0 %v554, 96
        %v560 = vpop.permute.xlu0 %559
        %562 = vxpose.xlu0.b32.start [1/16] %v560, 128
        %563 = vxpose.xlu0.b32.cont [2/16] 0.0, 128
        %564 = vxpose.xlu0.b32.cont [3/16] 0.0, 128
        %565 = vxpose.xlu0.b32.cont [4/16] 0.0, 128
        %566 = vxpose.xlu0.b32.cont [5/16] 0.0, 128
        %567 = vxpose.xlu0.b32.cont [6/16] 0.0, 128
        %568 = vxpose.xlu0.b32.cont [7/16] 0.0, 128
        %569 = vxpose.xlu0.b32.cont [8/16] 0.0, 128
        %570 = vxpose.xlu0.b32.cont [9/16] 0.0, 128
        %571 = vxpose.xlu0.b32.cont [10/16] 0.0, 128
        %572 = vxpose.xlu0.b32.cont [11/16] 0.0, 128
        %573 = vxpose.xlu0.b32.cont [12/16] 0.0, 128
        %574 = vxpose.xlu0.b32.cont [13/16] 0.0, 128
        %575 = vxpose.xlu0.b32.cont [14/16] 0.0, 128
        %576 = vxpose.xlu0.b32.cont [15/16] 0.0, 128
        %577 = vxpose.xlu0.b32.end [16/16] 0.0, 128
        %v578 = vpop.trf.xlu0
        %v579 = vpop.trf.xlu0
        %v580 = vpop.trf.xlu0
        %v581 = vpop.trf.xlu0
        %v582 = vpop.trf.xlu0
        %v583 = vpop.trf.xlu0
        %v584 = vpop.trf.xlu0
        %v585 = vpop.trf.xlu0
        %v586 = vpop.trf.xlu0
        %v587 = vpop.trf.xlu0
        %v588 = vpop.trf.xlu0
        %v589 = vpop.trf.xlu0
        %v590 = vpop.trf.xlu0
        %v591 = vpop.trf.xlu0
        %v592 = vpop.trf.xlu0
        %v593 = vpop.trf.xlu0
        %v594 = vpack.c.bf16 %v578, %v578
        %v595 = vpack.c.bf16 %v579, %v579
        %v596 = vpack.c.bf16 %v580, %v580
        %v597 = vpack.c.bf16 %v581, %v581
        %v598 = vlaneseq
        %v599 = vshrl.u32 %v598, 7
        %v600 = vlaneseq
        %v601 = vand.u32 %v600, 127
        %vm602 = vcmp.le.s32.totalorder %v601, %v599
        %v603 = vsel %vm602, 0.0, -1e+30
        %vm604 = vcmask 64512
        %v606 = vsel %vm604, %v557, 0
        %vm608 = vcmask 1043456
        %v610 = vsel %vm608, %v594, 0
        %612 = vmatpush.bf16.msra.mxu0 0
        %613 = vmatpush.bf16.msra.mxu0 0
        %614 = vmatpush.bf16.msra.mxu0 0
        %615 = vmatpush.bf16.msra.mxu0 0
        %616 = vmatpush.bf16.msra.mxu0 0
        %617 = vmatpush.bf16.msra.mxu0 0
        %618 = vmatpush.bf16.msra.mxu0 0
        %619 = vmatpush.bf16.msra.mxu0 %v610
        %620 = vmatmul.bf16.gmra.mxu0 %v606
        %v621 = vpop.f32.mrf.mxu0
        %v622 = vadd.f32 %v603, %v621
        %v623 = vpop.f32.mrf.mxu0
        %624 = vdwg.mxu0
        %v625 = vsel %vm604, %v622, -inf
        %626 = vmax.xlane.f32.xlu0 %v625
        %v627 = vpop.xlane.xlu0 %626
        %v628 = vsub.f32 %v622, %v627
        %v629 = vmul.f32 %v628, 1.442695
        %v630 = vpow.pop %v629
        %v631 = vsel %vm604, %v630, 0.0
        %632 = vadd.xlane.f32.xlu0 %v631
        %v633 = vpop.xlane.xlu0 %632
        %v634 = vrcp.pop %v633
        %v635 = vmul.f32 %v630, %v634
        %v636 = vpack.c.bf16 %v635, %v635
        %v638 = vunpack.c.l.b16 %v557
        %v639 = vpack.c.b16 %v638, %v638
        %640 = vrot.lane.b32.xlu0 %v639, 64
        %v641 = vpop.permute.xlu0 %640
        %v643 = vsel %vm604, %v636, 0
        %v646 = vsel %vm608, %v641, 0
        %648 = vmatpush.bf16.msra.mxu0 0
        %649 = vmatpush.bf16.msra.mxu0 0
        %650 = vmatpush.bf16.msra.mxu0 0
        %651 = vmatpush.bf16.msra.mxu0 0
        %652 = vmatpush.bf16.msra.mxu0 0
        %653 = vmatpush.bf16.msra.mxu0 0
        %654 = vmatpush.bf16.msra.mxu0 0
        %655 = vmatpush.bf16.msra.mxu0 %v646
        %656 = vmatmul.bf16.gmra.mxu0 %v643
        %v657 = vpop.f32.mrf.mxu0
        %v658 = vadd.f32 0.0, %v657
        %v659 = vpop.f32.mrf.mxu0
        %660 = vdwg.mxu0
        %661 = vst.msk [vmem:[#allocation3] sm:$0xff] %vm604, %v658
        %662 = vrot.lane.b32.xlu0 %v639, 120
        %v663 = vpop.permute.xlu0 %662
        %v665 = vsel %vm604, %v663, 0
        %v668 = vsel %vm608, %v595, 0
        %670 = vmatpush.bf16.msra.mxu0 0
        %671 = vmatpush.bf16.msra.mxu0 0
        %672 = vmatpush.bf16.msra.mxu0 0
        %673 = vmatpush.bf16.msra.mxu0 0
        %674 = vmatpush.bf16.msra.mxu0 0
        %675 = vmatpush.bf16.msra.mxu0 0
        %676 = vmatpush.bf16.msra.mxu0 0
        %677 = vmatpush.bf16.msra.mxu0 %v668
        %678 = vmatmul.bf16.gmra.mxu0 %v665
        %v679 = vpop.f32.mrf.mxu0
        %v680 = vadd.f32 %v603, %v679
        %v681 = vpop.f32.mrf.mxu0
        %682 = vdwg.mxu0
        %v683 = vsel %vm604, %v680, -inf
        %684 = vmax.xlane.f32.xlu0 %v683
        %v685 = vpop.xlane.xlu0 %684
        %v686 = vsub.f32 %v680, %v685
        %v687 = vmul.f32 %v686, 1.442695
        %v688 = vpow.pop %v687
        %v689 = vsel %vm604, %v688, 0.0
        %690 = vadd.xlane.f32.xlu0 %v689
        %v691 = vpop.xlane.xlu0 %690
        %v692 = vrcp.pop %v691
        %v693 = vmul.f32 %v688, %v692
        %v694 = vpack.c.bf16 %v693, %v693
        %695 = vrot.lane.b32.xlu0 %v639, 56
        %v696 = vpop.permute.xlu0 %695
        %v698 = vsel %vm604, %v694, 0
        %v701 = vsel %vm608, %v696, 0
        %703 = vmatpush.bf16.msra.mxu0 0
        %704 = vmatpush.bf16.msra.mxu0 0
        %705 = vmatpush.bf16.msra.mxu0 0
        %706 = vmatpush.bf16.msra.mxu0 0
        %707 = vmatpush.bf16.msra.mxu0 0
        %708 = vmatpush.bf16.msra.mxu0 0
        %709 = vmatpush.bf16.msra.mxu0 0
        %710 = vmatpush.bf16.msra.mxu0 %v701
        %711 = vmatmul.bf16.gmra.mxu0 %v698
        %v712 = vpop.f32.mrf.mxu0
        %v713 = vadd.f32 0.0, %v712
        %v714 = vpop.f32.mrf.mxu0
        %715 = vdwg.mxu0
        %717 = vrot.lane.b32.xlu0 %v713, 8
        %v718 = vpop.permute.xlu0 %717
        %vm720 = vcmask 130112
        %721 = vst.msk [vmem:[#allocation3] sm:$0xff] %vm720, %v718
        %722 = vrot.lane.b32.xlu0 %v639, 112
        %v723 = vpop.permute.xlu0 %722
        %v725 = vsel %vm604, %v723, 0
        %v728 = vsel %vm608, %v596, 0
        %730 = vmatpush.bf16.msra.mxu0 0
        %731 = vmatpush.bf16.msra.mxu0 0
        %732 = vmatpush.bf16.msra.mxu0 0
        %733 = vmatpush.bf16.msra.mxu0 0
        %734 = vmatpush.bf16.msra.mxu0 0
        %735 = vmatpush.bf16.msra.mxu0 0
        %736 = vmatpush.bf16.msra.mxu0 0
        %737 = vmatpush.bf16.msra.mxu0 %v728
        %738 = vmatmul.bf16.gmra.mxu0 %v725
        %v739 = vpop.f32.mrf.mxu0
        %v740 = vadd.f32 %v603, %v739
        %v741 = vpop.f32.mrf.mxu0
        %742 = vdwg.mxu0
        %v743 = vsel %vm604, %v740, -inf
        %744 = vmax.xlane.f32.xlu0 %v743
        %v745 = vpop.xlane.xlu0 %744
        %v746 = vsub.f32 %v740, %v745
        %v747 = vmul.f32 %v746, 1.442695
        %v748 = vpow.pop %v747
        %v749 = vsel %vm604, %v748, 0.0
        %750 = vadd.xlane.f32.xlu0 %v749
        %v751 = vpop.xlane.xlu0 %750
        %v752 = vrcp.pop %v751
        %v753 = vmul.f32 %v748, %v752
        %v754 = vpack.c.bf16 %v753, %v753
        %755 = vrot.lane.b32.xlu0 %v639, 48
        %v756 = vpop.permute.xlu0 %755
        %v758 = vsel %vm604, %v754, 0
        %v761 = vsel %vm608, %v756, 0
        %763 = vmatpush.bf16.msra.mxu0 0
        %764 = vmatpush.bf16.msra.mxu0 0
        %765 = vmatpush.bf16.msra.mxu0 0
        %766 = vmatpush.bf16.msra.mxu0 0
        %767 = vmatpush.bf16.msra.mxu0 0
        %768 = vmatpush.bf16.msra.mxu0 0
        %769 = vmatpush.bf16.msra.mxu0 0
        %770 = vmatpush.bf16.msra.mxu0 %v761
        %771 = vmatmul.bf16.gmra.mxu0 %v758
        %v772 = vpop.f32.mrf.mxu0
        %v773 = vadd.f32 0.0, %v772
        %v774 = vpop.f32.mrf.mxu0
        %775 = vdwg.mxu0
        %777 = vrot.lane.b32.xlu0 %v773, 16
        %v778 = vpop.permute.xlu0 %777
        %vm780 = vcmask 195712
        %781 = vst.msk [vmem:[#allocation3] sm:$0xff] %vm780, %v778
        %782 = vrot.lane.b32.xlu0 %v639, 104
        %v783 = vpop.permute.xlu0 %782
        %v785 = vsel %vm604, %v783, 0
        %v788 = vsel %vm608, %v597, 0
        %790 = vmatpush.bf16.msra.mxu0 0
        %791 = vmatpush.bf16.msra.mxu0 0
        %792 = vmatpush.bf16.msra.mxu0 0
        %793 = vmatpush.bf16.msra.mxu0 0
        %794 = vmatpush.bf16.msra.mxu0 0
        %795 = vmatpush.bf16.msra.mxu0 0
        %796 = vmatpush.bf16.msra.mxu0 0
        %797 = vmatpush.bf16.msra.mxu0 %v788
        %798 = vmatmul.bf16.gmra.mxu0 %v785
        %v799 = vpop.f32.mrf.mxu0
        %v800 = vadd.f32 %v603, %v799
        %v801 = vpop.f32.mrf.mxu0
        %802 = vdwg.mxu0
        %v803 = vsel %vm604, %v800, -inf
        %804 = vmax.xlane.f32.xlu0 %v803
        %v805 = vpop.xlane.xlu0 %804
        %v806 = vsub.f32 %v800, %v805
        %v807 = vmul.f32 %v806, 1.442695
        %v808 = vpow.pop %v807
        %v809 = vsel %vm604, %v808, 0.0
        %810 = vadd.xlane.f32.xlu0 %v809
        %v811 = vpop.xlane.xlu0 %810
        %v812 = vrcp.pop %v811
        %v813 = vmul.f32 %v808, %v812
        %v814 = vpack.c.bf16 %v813, %v813
        %815 = vrot.lane.b32.xlu0 %v639, 40
        %v816 = vpop.permute.xlu0 %815
        %v818 = vsel %vm604, %v814, 0
        %v821 = vsel %vm608, %v816, 0
        %823 = vmatpush.bf16.msra.mxu0 0
        %824 = vmatpush.bf16.msra.mxu0 0
        %825 = vmatpush.bf16.msra.mxu0 0
        %826 = vmatpush.bf16.msra.mxu0 0
        %827 = vmatpush.bf16.msra.mxu0 0
        %828 = vmatpush.bf16.msra.mxu0 0
        %829 = vmatpush.bf16.msra.mxu0 0
        %830 = vmatpush.bf16.msra.mxu0 %v821
        %831 = vmatmul.bf16.gmra.mxu0 %v818
        %v832 = vpop.f32.mrf.mxu0
        %v833 = vadd.f32 0.0, %v832
        %v834 = vpop.f32.mrf.mxu0
        %835 = vdwg.mxu0
        %837 = vrot.lane.b32.xlu0 %v833, 24
        %v838 = vpop.permute.xlu0 %837
        %vm840 = vcmask 261312
        %841 = vst.msk [vmem:[#allocation3] sm:$0xff] %vm840, %v838
        %v842 = vld [vmem:[#allocation3] sm:$0xff]
        %v843 = vpack.c.bf16 %v842, %v842
        %v844 = vld [vmem:[%s5] sm:$0xf]
        %v845 = vld [vmem:[%s5 + $0x4] sm:$0xf]
        %v846 = vld [vmem:[%s5 + $0x8] sm:$0xf]
        %v847 = vld [vmem:[%s5 + $0xc] sm:$0xf]
        %v848 = vld [vmem:[%s6] sm:$0x1]
        %v850 = vperm.slane %v848, 0
        %v856 = vunpack.c.l.b16 %v844
        %v857 = vunpack.c.l.b16 %v845
        %v858 = vunpack.c.l.b16 %v846
        %v859 = vunpack.c.l.b16 %v847
        %v860 = vpack.c.b16 %v857, %v856
        %v861 = vpack.c.b16 %v859, %v858
        %v865 = vsel %vm485, %v843, 0
        %867 = vmatpush.bf16.msra.mxu0 0
        %868 = vmatpush.bf16.msra.mxu0 0
        %869 = vmatpush.bf16.msra.mxu0 0
        %870 = vmatpush.bf16.msra.mxu0 0
        %871 = vmatpush.bf16.msra.mxu0 0
        %872 = vmatpush.bf16.msra.mxu0 0
        %873 = vmatpush.bf16.msra.mxu0 %v861
        %874 = vmatpush.bf16.msra.mxu0 %v860
        %875 = vmatmul.bf16.gmra.mxu0 %v865
        %v876 = vpop.f32.mrf.mxu0
        %v877 = vadd.f32 %v850, %v876
        %v878 = vpop.f32.mrf.mxu0
        %879 = vdwg.mxu0
        %v880 = vadd.f32 %v484, %v877
        %v881 = vsel %vm485, %v880, 0.0
        %882 = vadd.xlane.f32.xlu0 %v881
        %v883 = vpop.xlane.xlu0 %882
        %v884 = vmul.f32 %v883, 0.03125
        %v885 = vmul.f32 %v880, %v880
        %v886 = vsel %vm485, %v885, 0.0
        %887 = vadd.xlane.f32.xlu0 %v886
        %v888 = vpop.xlane.xlu0 %887
        %v889 = vmul.f32 %v888, 0.03125
        %v890 = vmul.f32 %v884, %v884
        %v891 = vsub.f32 %v889, %v890
        %v892 = vsub.f32 %v880, %v884
        %v893 = vadd.f32 %v891, 1e-05
        %v894 = vrsqrt.pop %v893
        %v895 = vmul.f32 %v894, %v893
        %v896 = vmul.f32 %v895, %v894
        %v897 = vmul.f32 0.5, %v896
        %v898 = vsub.f32 1.5, %v897
        %v899 = vmul.f32 %v894, %v898
        %vm900 = vweird.f32 %v893
        %vm901 = vweird.f32 %v894
        %vm902 = vmor %vm900, %vm901
        %v903 = vsel %vm902, %v894, %v899
        %v904 = vmul.f32 %v892, %v903
        %v905 = vld [vmem:[%s7] sm:$0x1]
        %v907 = vperm.slane %v905, 0
        %v909 = vmul.f32 %v904, %v907
        %v910 = vld [vmem:[%s8] sm:$0x1]
        %v912 = vperm.slane %v910, 0
        %v914 = vadd.f32 %v909, %v912
        %v915 = vpack.c.bf16 %v914, %v914
        %v916 = vld [vmem:[%s9] sm:$0xf]
        %v917 = vld [vmem:[%s9 + $0x4] sm:$0xf]
        %v918 = vld [vmem:[%s9 + $0x8] sm:$0xf]
        %v919 = vld [vmem:[%s9 + $0xc] sm:$0xf]
        %v920 = vld [vmem:[%s10] sm:$0x1]
        %v922 = vperm.slane %v920, 0
        %v928 = vunpack.c.l.b16 %v916
        %v929 = vunpack.c.l.b16 %v917
        %v930 = vunpack.c.l.b16 %v918
        %v931 = vunpack.c.l.b16 %v919
        %v932 = vpack.c.b16 %v929, %v928
        %v933 = vpack.c.b16 %v931, %v930
        %v937 = vsel %vm485, %v915, 0
        %939 = vmatpush.bf16.msra.mxu0 0
        %940 = vmatpush.bf16.msra.mxu0 0
        %941 = vmatpush.bf16.msra.mxu0 0
        %942 = vmatpush.bf16.msra.mxu0 0
        %943 = vmatpush.bf16.msra.mxu0 0
        %944 = vmatpush.bf16.msra.mxu0 0
        %945 = vmatpush.bf16.msra.mxu0 %v933
        %946 = vmatpush.bf16.msra.mxu0 %v932
        %947 = vmatmul.bf16.gmra.mxu0 %v937
        %v948 = vpop.f32.mrf.mxu0
        %v949 = vadd.f32 %v922, %v948
        %v950 = vpop.f32.mrf.mxu0
        %951 = vdwg.mxu0
        %v952 = vmul.f32 %v949, 0.5
        %v953 = vmul.f32 %v949, 0.044715
        %v954 = vmul.f32 %v953, %v949
        %v955 = vmul.f32 %v954, %v949
        %v956 = vadd.f32 %v949, %v955
        %v957 = vmul.f32 %v956, 0.7978846
        %v958 = vtanh.pop %v957
        %v959 = vadd.f32 %v958, 1.0
        %v960 = vmul.f32 %v952, %v959
        %v961 = vpack.c.bf16 %v960, %v960
        %v962 = vld [vmem:[%s11] sm:$0xf]
        %v963 = vld [vmem:[%s11 + $0x4] sm:$0xf]
        %v964 = vld [vmem:[%s11 + $0x8] sm:$0xf]
        %v965 = vld [vmem:[%s11 + $0xc] sm:$0xf]
        %v966 = vld [vmem:[%s11 + $0x10] sm:$0xf]
        %v967 = vld [vmem:[%s11 + $0x14] sm:$0xf]
        %v968 = vld [vmem:[%s11 + $0x18] sm:$0xf]
        %v969 = vld [vmem:[%s11 + $0x1c] sm:$0xf]
        %v970 = vld [vmem:[%s11 + $0x20] sm:$0xf]
        %v971 = vld [vmem:[%s11 + $0x24] sm:$0xf]
        %v972 = vld [vmem:[%s11 + $0x28] sm:$0xf]
        %v973 = vld [vmem:[%s11 + $0x2c] sm:$0xf]
        %v974 = vld [vmem:[%s11 + $0x30] sm:$0xf]
        %v975 = vld [vmem:[%s11 + $0x34] sm:$0xf]
        %v976 = vld [vmem:[%s11 + $0x38] sm:$0xf]
        %v977 = vld [vmem:[%s11 + $0x3c] sm:$0xf]
        %v978 = vld [vmem:[%s12] sm:$0x1]
        %v980 = vperm.slane %v978, 0
        %v998 = vunpack.c.l.b16 %v962
        %v999 = vunpack.c.l.b16 %v963
        %v1000 = vunpack.c.l.b16 %v964
        %v1001 = vunpack.c.l.b16 %v965
        %v1002 = vunpack.c.l.b16 %v966
        %v1003 = vunpack.c.l.b16 %v967
        %v1004 = vunpack.c.l.b16 %v968
        %v1005 = vunpack.c.l.b16 %v969
        %v1006 = vunpack.c.l.b16 %v970
        %v1007 = vunpack.c.l.b16 %v971
        %v1008 = vunpack.c.l.b16 %v972
        %v1009 = vunpack.c.l.b16 %v973
        %v1010 = vunpack.c.l.b16 %v974
        %v1011 = vunpack.c.l.b16 %v975
        %v1012 = vunpack.c.l.b16 %v976
        %v1013 = vunpack.c.l.b16 %v977
        %v1014 = vpack.c.b16 %v999, %v998
        %v1015 = vpack.c.b16 %v1001, %v1000
        %v1016 = vpack.c.b16 %v1003, %v1002
        %v1017 = vpack.c.b16 %v1005, %v1004
        %v1018 = vpack.c.b16 %v1007, %v1006
        %v1019 = vpack.c.b16 %v1009, %v1008
        %v1020 = vpack.c.b16 %v1011, %v1010
        %v1021 = vpack.c.b16 %v1013, %v1012
        %1030 = vmatpush.bf16.msra.mxu0 %v1021
        %1031 = vmatpush.bf16.msra.mxu0 %v1020
        %1032 = vmatpush.bf16.msra.mxu0 %v1019
        %1033 = vmatpush.bf16.msra.mxu0 %v1018
        %1034 = vmatpush.bf16.msra.mxu0 %v1017
        %1035 = vmatpush.bf16.msra.mxu0 %v1016
        %1036 = vmatpush.bf16.msra.mxu0 %v1015
        %1037 = vmatpush.bf16.msra.mxu0 %v1014
        %1038 = vmatmul.bf16.gmra.mxu0 %v961
        %v1039 = vpop.f32.mrf.mxu0
        %v1040 = vadd.f32 %v980, %v1039
        %v1041 = vpop.f32.mrf.mxu0
        %1042 = vdwg.mxu0
        %v1043 = vadd.f32 %v880, %v1040
        %v1044 = vlaneseq
        %vm1045 = vcmp.ge.s32.totalorder %v1044, 0
        %vm1046 = vcmp.lt.s32.totalorder %v1044, 32
        %vm1047 = vmand %vm1045, %vm1046
        %1048 = vst.msk [vmem:[%s431] sm:$0x1] %vm1047, %v1043
        %1050 = vst [vmem:[#allocation1] sm:$0xff] %v1043
        %s1051 = scalar_lea.vmem [#allocation1], 1
        %v1052 = vld [vmem:[%s1051] ss:$9 sm:$0xff]
        %1053 = vrot.lane.b32.xlu0 %v1052, 32
        %v1054 = vpop.permute.xlu0 %1053
        %vm1056 = vcmp.ge.s32.totalorder %v1044, 32
        %vm1057 = vcmp.lt.s32.totalorder %v1044, 64
        %vm1058 = vmand %vm1056, %vm1057
        %1059 = vst.msk [vmem:[%s431] sm:$0x1] %vm1058, %v1054
        %1060 = vst [vmem:[#allocation1] sm:$0xff] %v1043
        %s1061 = scalar_lea.vmem [#allocation1], 2
        %v1062 = vld [vmem:[%s1061] ss:$9 sm:$0xff]
        %1063 = vrot.lane.b32.xlu0 %v1062, 64
        %v1064 = vpop.permute.xlu0 %1063
        %vm1066 = vcmp.ge.s32.totalorder %v1044, 64
        %vm1067 = vcmp.lt.s32.totalorder %v1044, 96
        %vm1068 = vmand %vm1066, %vm1067
        %1069 = vst.msk [vmem:[%s431] sm:$0x1] %vm1068, %v1064
        %1070 = vst [vmem:[#allocation1] sm:$0xff] %v1043
        %s1071 = scalar_lea.vmem [#allocation1], 3
        %v1072 = vld [vmem:[%s1071] ss:$9 sm:$0xff]
        %1073 = vrot.lane.b32.xlu0 %v1072, 96
        %v1074 = vpop.permute.xlu0 %1073
        %vm1076 = vcmp.ge.s32.totalorder %v1044, 96
        %vm1077 = vcmp.lt.s32.totalorder %v1044, 128
        %vm1078 = vmand %vm1076, %vm1077
        %1079 = vst.msk [vmem:[%s431] sm:$0x1] %vm1078, %v1074
        %1080 = vst [vmem:[#allocation1] sm:$0xff] %v1043
        %s1081 = scalar_lea.vmem [#allocation1], 4
        %v1082 = vld [vmem:[%s1081] ss:$9 sm:$0xff]
        %1084 = vst.msk [vmem:[%s431 + $0x1] sm:$0x1] %vm1047, %v1082
        %1085 = vst [vmem:[#allocation1] sm:$0xff] %v1043
        %s1086 = scalar_lea.vmem [#allocation1], 5
        %v1087 = vld [vmem:[%s1086] ss:$9 sm:$0xff]
        %1088 = vrot.lane.b32.xlu0 %v1087, 32
        %v1089 = vpop.permute.xlu0 %1088
        %1091 = vst.msk [vmem:[%s431 + $0x1] sm:$0x1] %vm1058, %v1089
        %1092 = vst [vmem:[#allocation1] sm:$0xff] %v1043
        %s1093 = scalar_lea.vmem [#allocation1], 6
        %v1094 = vld [vmem:[%s1093] ss:$9 sm:$0xff]
        %1095 = vrot.lane.b32.xlu0 %v1094, 64
        %v1096 = vpop.permute.xlu0 %1095
        %1098 = vst.msk [vmem:[%s431 + $0x1] sm:$0x1] %vm1068, %v1096
        %1099 = vst [vmem:[#allocation1] sm:$0xff] %v1043
        %s1100 = scalar_lea.vmem [#allocation1], 7
        %v1101 = vld [vmem:[%s1100] ss:$9 sm:$0xff]
        %1102 = vrot.lane.b32.xlu0 %v1101, 96
        %v1103 = vpop.permute.xlu0 %1102
        %1105 = vst.msk [vmem:[%s431 + $0x1] sm:$0x1] %vm1078, %v1103
        %s1106 = sand.u32 %s313, 1
        %s1107 = scalar_lea.sflag [#allocation5], %s1106
        %s1108 = sand.u32 %s313, 1
        %s1109 = smul.addr %s1108, 2
        %s1110 = scalar_lea.vmem [#allocation4], %s1109
        // Predicated region
        $region73: #{tpu_custom_call.1} parent=71 // pred_check
          %p1111 = pneg %p323
        $region74: #{tpu_custom_call.1} parent=71 // pred_check_branch
          %1113 = sbr.rel (%p1111) target = $region76
        $region75: #{tpu_custom_call.1} parent=71 // pred_region
          %1115 = vsyncadd %s1107, 0
          %s1116 = smul.addr %s27, 2
          %s1117 = scalar_lea.hbm %s13, %s1116
          %s1119 = sshll.u32 %s1110, 4
          %s1120 = int_to_ptr.vmem [resolvable:$true] %s1119
          %s1121 = sshll.u32 %s1117, 4
          %s1122 = int_to_ptr.hbm [resolvable:$true] %s1121
          %1124 = dma.vmem_to_hbm [thread:$0]  %s1120, 32, %s1122, %s1107
        $region76: #{tpu_custom_call.1} parent=71 // pred_fallthru
          _
      $region72: #{tpu_custom_call.1} parent=5 // pred_fallthru
        _
      %p1125 = scmp.le.s32.totalorder 2, %s22
      // Predicated region
      $region77: #{tpu_custom_call.1} parent=5 // pred_check
        %p1126 = pneg %p1125
      $region78: #{tpu_custom_call.1} parent=5 // pred_check_branch
        %1128 = sbr.rel (%p1126) target = $region80
      $region79: #{tpu_custom_call.1} parent=5 // pred_region
        %s1129 = ssub.s32 %s22, 2
        // Predicated region
        $region81: #{tpu_custom_call.1} parent=79 // pred_check
          %p1130 = pneg %p329
        $region82: #{tpu_custom_call.1} parent=79 // pred_check_branch
          %1132 = sbr.rel (%p1130) target = $region84
        $region83: #{tpu_custom_call.1} parent=79 // pred_region
          %s1133 = sand.u32 %s314, 1
          %s1134 = scalar_lea.sflag [#allocation5], %s1133
          %s1135 = sand.u32 %s314, 1
          %s1136 = smul.addr %s1135, 2
          %s1137 = scalar_lea.vmem [#allocation4], %s1136
          %1139 = dma.done %s1134, 32
        $region84: #{tpu_custom_call.1} parent=79 // pred_fallthru
          _
      $region80: #{tpu_custom_call.1} parent=5 // pred_fallthru
        _
    $region6: #{tpu_custom_call.1} parent=1 // loop_footer
      %s26 = sadd.s32 1, %s22
    $region7: #{tpu_custom_call.1} parent=1 // loop_footer_branch
      %21 = sbr.rel target = $region3
    $region8: #{tpu_custom_call.1} parent=1 // loop_exit
      _
    %1140 = vsyncpa [#allocation5], 1
    %s1141 = scalar_lea.sflag [#allocation5], 1
    %1142 = vsyncpa %s1141, 1

</llo_original>
